<compile_context>
chip_gen: v7x
topology: tpu7x:2x2x1
jax: 0.10.0
libtpu: 0.0.40
codegen_flags: <defaults>
</compile_context>

<pallas_src>
import math
import functools

import jax
import jax.numpy as jnp
from jax.experimental import pallas as pl
from jax.experimental.pallas import tpu as pltpu


_VMEM_LIMIT = 48 * 1024 * 1024  # safe on v5e/v6e (128 MiB) and v7x (64 MiB physical)


def _round_up(x, m):
    return (x + m - 1) // m * m


def _default_row_tile():
    """128-row tiles on v5e (4x128x128 MXU, single vst slot); 256 on v6e/v7x."""
    try:
        info = pltpu.get_tpu_info()
        name = str(getattr(info, "chip_version", info)).lower()
        if "v5" in name:
            return 128
    except Exception:
        pass
    return 256


# --------------------------------------------------------------------------------------
# Relative position bias (tiny [1, H, S, S] tensor; computed in plain JAX, gather-heavy)
# --------------------------------------------------------------------------------------
def _relative_position_bucket(relative_position, bidirectional, num_buckets, max_distance=128):
    ret = jnp.zeros_like(relative_position)
    n = -relative_position
    if bidirectional:
        num_buckets //= 2
        ret = ret + (n < 0).astype(jnp.int32) * num_buckets
        n = jnp.abs(n)
    else:
        n = jnp.maximum(n, 0)
    max_exact = num_buckets // 2
    is_small = n < max_exact
    val_if_large = max_exact + (
        jnp.log(n.astype(jnp.float32) / max_exact)
        / math.log(max_distance / max_exact)
        * (num_buckets - max_exact)
    ).astype(jnp.int32)
    val_if_large = jnp.minimum(val_if_large, num_buckets - 1)
    ret = ret + jnp.where(is_small, n, val_if_large)
    return ret


def compute_bias(qlen, klen, rel_emb, *, bidirectional, num_buckets):
    context_position = jnp.arange(qlen, dtype=jnp.int32)[:, None]
    memory_position = jnp.arange(klen, dtype=jnp.int32)[None, :]
    relative_position = memory_position - context_position
    rp_bucket = _relative_position_bucket(relative_position, bidirectional, num_buckets)
    values = rel_emb[rp_bucket]                       # [qlen, klen, n_heads]
    return jnp.transpose(values, (2, 0, 1))[None]     # [1, n_heads, qlen, klen]


# --------------------------------------------------------------------------------------
# Kernel 1: row-tiled linear y = x @ W, with W pre-transposed to [K, N] (resident weight,
# constant index_map -> fetched once; fp32 MXU accumulation; lane-dense output).
# Used for both the fused QKV projection (N = 3*inner) and the output projection.
# --------------------------------------------------------------------------------------
def _linear_kernel(x_ref, w_ref, o_ref):
    o_ref[...] = jax.lax.dot_general(
        x_ref[...], w_ref[...], (((1,), (0,)), ((), ())),
        preferred_element_type=jnp.float32).astype(o_ref.dtype)


def _linear(x2d, w, *, tm):
    M, K = x2d.shape
    K2, N = w.shape
    assert K == K2
    Mp = _round_up(M, tm)
    if Mp != M:
        x2d = jnp.pad(x2d, ((0, Mp - M), (0, 0)))
    itemsize = jnp.dtype(x2d.dtype).itemsize
    cost = pl.CostEstimate(
        flops=2 * Mp * K * N,
        transcendentals=0,
        bytes_accessed=(Mp * K + K * N + Mp * N) * itemsize,
    )
    out = pl.pallas_call(
        _linear_kernel,
        out_shape=jax.ShapeDtypeStruct((Mp, N), x2d.dtype),
        grid_spec=pltpu.PrefetchScalarGridSpec(
            num_scalar_prefetch=0,
            grid=(Mp // tm,),
            in_specs=[
                pl.BlockSpec((tm, K), lambda i: (i, 0)),
                pl.BlockSpec((K, N), lambda i: (0, 0)),     # resident weight, one DMA
            ],
            out_specs=pl.BlockSpec((tm, N), lambda i: (i, 0)),
        ),
        compiler_params=pltpu.CompilerParams(
            dimension_semantics=("parallel",),
            vmem_limit_bytes=_VMEM_LIMIT),
        cost_estimate=cost,
    )(x2d, w)
    return out[:M] if Mp != M else out


# --------------------------------------------------------------------------------------
# Kernel 2: attention core per batch element (all heads in one step):
#   scores + bias, f32 softmax, weights @ v, lane-dense [S, inner] output.
# Inputs: fused qkv [B, S, 3*inner] (no head transpose), bias [Bb, H, S, S] in model
# dtype with a constant index_map (fetched once for the whole grid when Bb == 1).
# --------------------------------------------------------------------------------------
def _attn_core_kernel(qkv_ref, b_ref, o_ref, *, n_heads, d_kv):
    inner = n_heads * d_kv
    ctx_heads = []
    for h in range(n_heads):                               # static loop, static slices
        q_h = qkv_ref[0, :, h * d_kv:(h + 1) * d_kv]                     # (S, Dk)
        k_h = qkv_ref[0, :, inner + h * d_kv:inner + (h + 1) * d_kv]     # (S, Dk)
        v_h = qkv_ref[0, :, 2 * inner + h * d_kv:2 * inner + (h + 1) * d_kv]
        bias_h = b_ref[0, h].astype(jnp.float32)                         # (S, S)

        # T5 does NOT scale scores by 1/sqrt(d_kv).
        scores = jax.lax.dot_general(
            q_h, k_h, (((1,), (1,)), ((), ())),
            preferred_element_type=jnp.float32) + bias_h

        m = jnp.max(scores, axis=-1, keepdims=True)
        e = jnp.exp(scores - m)
        # EUP approximate reciprocal + multiply instead of a VPU divide.
        weights = e * pl.reciprocal(jnp.sum(e, axis=-1, keepdims=True), approx=True)
        # TODO(synk): dropout on `weights` is identity (eval mode).

        ctx_h = jax.lax.dot_general(
            weights.astype(v_h.dtype), v_h, (((1,), (0,)), ((), ())),
            preferred_element_type=jnp.float32)
        ctx_heads.append(ctx_h.astype(o_ref.dtype))

    # Single lane-dense (S, inner) store; HBM writeback is one unmasked slab per batch.
    o_ref[0] = jnp.concatenate(ctx_heads, axis=-1)


def _attn_core(qkv, bias, *, n_heads, d_kv):
    B, S, three_inner = qkv.shape
    inner = n_heads * d_kv
    assert three_inner == 3 * inner
    Bb = bias.shape[0]
    bias_map = (lambda b: (b, 0, 0, 0)) if Bb > 1 else (lambda b: (0, 0, 0, 0))
    act_bytes = jnp.dtype(qkv.dtype).itemsize
    cost = pl.CostEstimate(
        flops=2 * B * n_heads * S * S * d_kv * 2,
        transcendentals=B * n_heads * S * S,
        bytes_accessed=B * S * (three_inner + inner) * act_bytes
        + Bb * n_heads * S * S * jnp.dtype(bias.dtype).itemsize,
    )
    kernel = functools.partial(_attn_core_kernel, n_heads=n_heads, d_kv=d_kv)
    return pl.pallas_call(
        kernel,
        out_shape=jax.ShapeDtypeStruct((B, S, inner), qkv.dtype),
        grid_spec=pltpu.PrefetchScalarGridSpec(
            num_scalar_prefetch=0,
            grid=(B,),
            in_specs=[
                pl.BlockSpec((1, S, three_inner), lambda b: (b, 0, 0)),
                pl.BlockSpec((1, n_heads, S, S), bias_map),   # constant -> fetched once
            ],
            out_specs=pl.BlockSpec((1, S, inner), lambda b: (b, 0, 0)),
        ),
        compiler_params=pltpu.CompilerParams(
            dimension_semantics=("parallel",),          # v7x megacore shards over batch
            vmem_limit_bytes=_VMEM_LIMIT),
        cost_estimate=cost,
    )(qkv, bias)


# --------------------------------------------------------------------------------------
# Full T5Attention forward (self-attention, eval mode)
# --------------------------------------------------------------------------------------
def t5_attention_forward(hidden_states, wq, wk, wv, wo, rel_bias_emb=None, *,
                         n_heads, d_kv, is_decoder=False,
                         relative_attention_num_buckets=32,
                         mask=None, position_bias=None, row_tile=None):
    """hidden_states: [B, S, d_model]; wq/wk/wv: [inner, d_model]; wo: [d_model, inner].

    Note: as in HF, `mask` is only folded into an internally-computed position_bias;
    if the caller supplies `position_bias`, `mask` is ignored.
    """
    B, S, d_model = hidden_states.shape
    inner = n_heads * d_kv
    M = B * S
    if row_tile is None:
        row_tile = _default_row_tile()
    tm = min(row_tile, _round_up(M, 8))

    # Pre-transposed, fused QKV weight [d_model, 3*inner] and Wo.T [inner, d_model].
    # In a real model these layout changes are done once at parameter-load time.
    w_qkv = jnp.concatenate([wq, wk, wv], axis=0).T
    wo_t = wo.T

    x2d = hidden_states.reshape(M, d_model)
    qkv2d = _linear(x2d, w_qkv, tm=tm)                    # [M, 3*inner], one matmul
    qkv = qkv2d.reshape(B, S, 3 * inner)                  # free reshape, no transpose

    if position_bias is None:
        if rel_bias_emb is None:
            raise ValueError("No position_bias provided and no weights to compute position_bias")
        position_bias = compute_bias(
            S, S, rel_bias_emb,
            bidirectional=not is_decoder,
            num_buckets=relative_attention_num_buckets)
        if mask is not None:
            position_bias = position_bias + mask
    # Stream the bias to the kernel in the model dtype; the kernel upcasts to f32.
    Bb = position_bias.shape[0]
    bias = jnp.broadcast_to(
        position_bias, (Bb, n_heads, S, S)).astype(hidden_states.dtype)

    ctx = _attn_core(qkv, bias, n_heads=n_heads, d_kv=d_kv)   # [B, S, inner], lane-dense
    out2d = _linear(ctx.reshape(M, inner), wo_t, tm=tm)       # output projection
    return out2d.reshape(B, S, d_model), position_bias


# --------------------------------------------------------------------------------------
# Self-test
# --------------------------------------------------------------------------------------
if __name__ == "__main__":
    # Small but lane-dense config: d_model and inner_dim are multiples of 128.
    B, S = 2, 16
    d_model, n_heads, d_kv = 128, 4, 32
    num_buckets = 32
    inner = n_heads * d_kv

    key = jax.random.PRNGKey(0)
    kx, kq, kk, kv_, ko, kb = jax.random.split(key, 6)
    x = jax.random.normal(kx, (B, S, d_model), dtype=jnp.float32)
    wq = jax.random.normal(kq, (inner, d_model), dtype=jnp.float32) * 0.05
    wk = jax.random.normal(kk, (inner, d_model), dtype=jnp.float32) * 0.05
    wv = jax.random.normal(kv_, (inner, d_model), dtype=jnp.float32) * 0.05
    wo = jax.random.normal(ko, (d_model, inner), dtype=jnp.float32) * 0.05
    rel_emb = jax.random.normal(kb, (num_buckets, n_heads), dtype=jnp.float32) * 0.1

    fwd = jax.jit(functools.partial(
        t5_attention_forward, n_heads=n_heads, d_kv=d_kv, is_decoder=False,
        relative_attention_num_buckets=num_buckets))
    out, _ = fwd(x, wq, wk, wv, wo, rel_emb)
    out = jax.block_until_ready(out)

    # Plain-JAX reference (same math as the PyTorch forward, eval mode).
    hp = jax.lax.Precision.HIGHEST

    def proj(t, w):   # t: [B, S, in], w: [out, in] -> t @ w.T
        return jax.lax.dot_general(t, w, (((2,), (1,)), ((), ())), precision=hp)

    qr = proj(x, wq).reshape(B, S, n_heads, d_kv).transpose(0, 2, 1, 3)
    kr = proj(x, wk).reshape(B, S, n_heads, d_kv).transpose(0, 2, 1, 3)
    vr = proj(x, wv).reshape(B, S, n_heads, d_kv).transpose(0, 2, 1, 3)
    scores = jnp.einsum("bnqd,bnkd->bnqk", qr, kr, precision=hp)
    pb = compute_bias(S, S, rel_emb, bidirectional=True, num_buckets=num_buckets)
    scores = scores + pb
    wts = jax.nn.softmax(scores.astype(jnp.float32), axis=-1).astype(scores.dtype)
    ctx = jnp.einsum("bnqk,bnkd->bnqd", wts, vr, precision=hp)
    ctx = ctx.transpose(0, 2, 1, 3).reshape(B, S, inner)
    ref = jax.lax.dot_general(ctx, wo, (((2,), (1,)), ((), ())), precision=hp)

    assert out.shape == (B, S, d_model)
    assert jnp.allclose(out, ref, atol=2e-3, rtol=2e-3), float(jnp.max(jnp.abs(out - ref)))

    print("KERNEL_OK")
</pallas_src>

<mosaic_0001>
module attributes {stable_mosaic.version = 11 : i64} {
  func.func @_linear_kernel(%arg0: i32, %arg1: memref<32x128xf32, #tpu.memory_space<vmem>>, %arg2: memref<128x384xf32, #tpu.memory_space<vmem>>, %arg3: memref<32x384xf32, #tpu.memory_space<vmem>>) attributes {dimension_semantics = [#tpu.dimension_semantics<parallel>], iteration_bounds = array<i64: 1>, scalar_prefetch = 0 : i64, scratch_operands = 0 : i64, tpu.core_type = #tpu.core_type<tc>, window_params = [{transform_indices = @transform_0, window_bounds = array<i64: 32, 128>}, {pipeline_mode = #tpu.pipeline_mode<synchronous>, transform_indices = @transform_1, window_bounds = array<i64: 128, 384>}, {transform_indices = @transform_2, window_bounds = array<i64: 32, 384>}]} {
    %c0 = arith.constant 0 : index
    %c0_0 = arith.constant 0 : index
    %0 = vector.load %arg1[%c0, %c0_0] : memref<32x128xf32, #tpu.memory_space<vmem>>, vector<32x128xf32>
    %c0_1 = arith.constant 0 : index
    %c0_2 = arith.constant 0 : index
    %1 = vector.load %arg2[%c0_1, %c0_2] : memref<128x384xf32, #tpu.memory_space<vmem>>, vector<128x384xf32>
    %cst = arith.constant dense<0.000000e+00> : vector<32x384xf32>
    %2 = tpu.matmul %0, %1, %cst {dimension_numbers = #tpu.dot_dimension_numbers<[1], [0], [0], [1], [0, 0, 1, 1], [], []>} : vector<32x128xf32>, vector<128x384xf32>, vector<32x384xf32> -> vector<32x384xf32>
    %c0_3 = arith.constant 0 : index
    %c0_4 = arith.constant 0 : index
    %3 = vector.load %arg3[%c0_3, %c0_4] : memref<32x384xf32, #tpu.memory_space<vmem>>, vector<32x384xf32>
    tpu.vector_store %arg3[%c0_3, %c0_4], %2 {strides = array<i32>} : memref<32x384xf32, #tpu.memory_space<vmem>>, vector<32x384xf32>,
    return
  }
  func.func @transform_0(%arg0: i32) -> (i32, i32) {
    %c0_i32 = arith.constant 0 : i32
    %c0_i32_0 = arith.constant 0 : i32
    return %arg0, %c0_i32 : i32, i32
  }
  func.func @transform_1(%arg0: i32) -> (i32, i32) {
    %c0_i32 = arith.constant 0 : i32
    %c0_i32_0 = arith.constant 0 : i32
    %c0_i32_1 = arith.constant 0 : i32
    return %c0_i32, %c0_i32_0 : i32, i32
  }
  func.func @transform_2(%arg0: i32) -> (i32, i32) {
    %c0_i32 = arith.constant 0 : i32
    %c0_i32_0 = arith.constant 0 : i32
    return %arg0, %c0_i32 : i32, i32
  }
}

module attributes {stable_mosaic.version = 11 : i64} {
  func.func @_attn_core_kernel(%arg0: i32, %arg1: memref<1x16x384xf32, #tpu.memory_space<vmem>>, %arg2: memref<1x4x16x16xf32, #tpu.memory_space<vmem>>, %arg3: memref<1x16x128xf32, #tpu.memory_space<vmem>>) attributes {dimension_semantics = [#tpu.dimension_semantics<parallel>], iteration_bounds = array<i64: 2>, scalar_prefetch = 0 : i64, scratch_operands = 0 : i64, tpu.core_type = #tpu.core_type<tc>, window_params = [{transform_indices = @transform_0, window_bounds = array<i64: 1, 16, 384>}, {pipeline_mode = #tpu.pipeline_mode<synchronous>, transform_indices = @transform_1, window_bounds = array<i64: 1, 4, 16, 16>}, {transform_indices = @transform_2, window_bounds = array<i64: 1, 16, 128>}]} {
    %c0 = arith.constant 0 : index
    %c0_0 = arith.constant 0 : index
    %c0_1 = arith.constant 0 : index
    %0 = vector.load %arg1[%c0, %c0_0, %c0_1] : memref<1x16x384xf32, #tpu.memory_space<vmem>>, vector<1x16x32xf32>
    %1 = vector.shape_cast %0 : vector<1x16x32xf32> to vector<16x32xf32>
    %c0_2 = arith.constant 0 : index
    %c0_3 = arith.constant 0 : index
    %c128 = arith.constant 128 : index
    %2 = vector.load %arg1[%c0_2, %c0_3, %c128] : memref<1x16x384xf32, #tpu.memory_space<vmem>>, vector<1x16x32xf32>
    %3 = vector.shape_cast %2 : vector<1x16x32xf32> to vector<16x32xf32>
    %c0_4 = arith.constant 0 : index
    %c0_5 = arith.constant 0 : index
    %c256 = arith.constant 256 : index
    %4 = vector.load %arg1[%c0_4, %c0_5, %c256] : memref<1x16x384xf32, #tpu.memory_space<vmem>>, vector<1x16x32xf32>
    %5 = vector.shape_cast %4 : vector<1x16x32xf32> to vector<16x32xf32>
    %c0_6 = arith.constant 0 : index
    %c0_7 = arith.constant 0 : index
    %c0_8 = arith.constant 0 : index
    %c0_9 = arith.constant 0 : index
    %6 = vector.load %arg2[%c0_6, %c0_7, %c0_8, %c0_9] : memref<1x4x16x16xf32, #tpu.memory_space<vmem>>, vector<1x1x16x16xf32>
    %7 = vector.shape_cast %6 : vector<1x1x16x16xf32> to vector<16x16xf32>
    %cst = arith.constant dense<0.000000e+00> : vector<16x16xf32>
    %8 = tpu.matmul %1, %3, %cst {dimension_numbers = #tpu.dot_dimension_numbers<[1], [1], [0], [0], [0, 0, 1, 0], [], []>} : vector<16x32xf32>, vector<16x32xf32>, vector<16x16xf32> -> vector<16x16xf32>
    %9 = arith.addf %8, %7 : vector<16x16xf32>
    %cst_10 = arith.constant dense<0xFF800000> : vector<16xf32>
    %10 = vector.multi_reduction <maximumf>, %9, %cst_10 [1] : vector<16x16xf32> to vector<16xf32>
    %11 = vector.shape_cast %10 : vector<16xf32> to vector<16x1xf32>
    %12 = vector.broadcast %11 : vector<16x1xf32> to vector<16x16xf32>
    %13 = arith.subf %9, %12 : vector<16x16xf32>
    %14 = math.exp %13 : vector<16x16xf32>
    %cst_11 = arith.constant dense<0.000000e+00> : vector<16xf32>
    %15 = vector.multi_reduction <add>, %14, %cst_11 [1] : vector<16x16xf32> to vector<16xf32>
    %16 = vector.shape_cast %15 : vector<16xf32> to vector<16x1xf32>
    %17 = tpu.reciprocal %16 {approx = true} : vector<16x1xf32> -> vector<16x1xf32>
    %18 = vector.broadcast %17 : vector<16x1xf32> to vector<16x16xf32>
    %19 = arith.mulf %14, %18 : vector<16x16xf32>
    %cst_12 = arith.constant dense<0.000000e+00> : vector<16x32xf32>
    %20 = tpu.matmul %19, %5, %cst_12 {dimension_numbers = #tpu.dot_dimension_numbers<[1], [0], [0], [1], [0, 0, 1, 1], [], []>} : vector<16x16xf32>, vector<16x32xf32>, vector<16x32xf32> -> vector<16x32xf32>
    %c0_13 = arith.constant 0 : index
    %c0_14 = arith.constant 0 : index
    %c32 = arith.constant 32 : index
    %21 = vector.load %arg1[%c0_13, %c0_14, %c32] : memref<1x16x384xf32, #tpu.memory_space<vmem>>, vector<1x16x32xf32>
    %22 = vector.shape_cast %21 : vector<1x16x32xf32> to vector<16x32xf32>
    %c0_15 = arith.constant 0 : index
    %c0_16 = arith.constant 0 : index
    %c160 = arith.constant 160 : index
    %23 = vector.load %arg1[%c0_15, %c0_16, %c160] : memref<1x16x384xf32, #tpu.memory_space<vmem>>, vector<1x16x32xf32>
    %24 = vector.shape_cast %23 : vector<1x16x32xf32> to vector<16x32xf32>
    %c0_17 = arith.constant 0 : index
    %c0_18 = arith.constant 0 : index
    %c288 = arith.constant 288 : index
    %25 = vector.load %arg1[%c0_17, %c0_18, %c288] : memref<1x16x384xf32, #tpu.memory_space<vmem>>, vector<1x16x32xf32>
    %26 = vector.shape_cast %25 : vector<1x16x32xf32> to vector<16x32xf32>
    %c0_19 = arith.constant 0 : index
    %c1 = arith.constant 1 : index
    %c0_20 = arith.constant 0 : index
    %c0_21 = arith.constant 0 : index
    %27 = vector.load %arg2[%c0_19, %c1, %c0_20, %c0_21] : memref<1x4x16x16xf32, #tpu.memory_space<vmem>>, vector<1x1x16x16xf32>
    %28 = vector.shape_cast %27 : vector<1x1x16x16xf32> to vector<16x16xf32>
    %cst_22 = arith.constant dense<0.000000e+00> : vector<16x16xf32>
    %29 = tpu.matmul %22, %24, %cst_22 {dimension_numbers = #tpu.dot_dimension_numbers<[1], [1], [0], [0], [0, 0, 1, 0], [], []>} : vector<16x32xf32>, vector<16x32xf32>, vector<16x16xf32> -> vector<16x16xf32>
    %30 = arith.addf %29, %28 : vector<16x16xf32>
    %cst_23 = arith.constant dense<0xFF800000> : vector<16xf32>
    %31 = vector.multi_reduction <maximumf>, %30, %cst_23 [1] : vector<16x16xf32> to vector<16xf32>
    %32 = vector.shape_cast %31 : vector<16xf32> to vector<16x1xf32>
    %33 = vector.broadcast %32 : vector<16x1xf32> to vector<16x16xf32>
    %34 = arith.subf %30, %33 : vector<16x16xf32>
    %35 = math.exp %34 : vector<16x16xf32>
    %cst_24 = arith.constant dense<0.000000e+00> : vector<16xf32>
    %36 = vector.multi_reduction <add>, %35, %cst_24 [1] : vector<16x16xf32> to vector<16xf32>
    %37 = vector.shape_cast %36 : vector<16xf32> to vector<16x1xf32>
    %38 = tpu.reciprocal %37 {approx = true} : vector<16x1xf32> -> vector<16x1xf32>
    %39 = vector.broadcast %38 : vector<16x1xf32> to vector<16x16xf32>
    %40 = arith.mulf %35, %39 : vector<16x16xf32>
    %cst_25 = arith.constant dense<0.000000e+00> : vector<16x32xf32>
    %41 = tpu.matmul %40, %26, %cst_25 {dimension_numbers = #tpu.dot_dimension_numbers<[1], [0], [0], [1], [0, 0, 1, 1], [], []>} : vector<16x16xf32>, vector<16x32xf32>, vector<16x32xf32> -> vector<16x32xf32>
    %c0_26 = arith.constant 0 : index
    %c0_27 = arith.constant 0 : index
    %c64 = arith.constant 64 : index
    %42 = vector.load %arg1[%c0_26, %c0_27, %c64] : memref<1x16x384xf32, #tpu.memory_space<vmem>>, vector<1x16x32xf32>
    %43 = vector.shape_cast %42 : vector<1x16x32xf32> to vector<16x32xf32>
    %c0_28 = arith.constant 0 : index
    %c0_29 = arith.constant 0 : index
    %c192 = arith.constant 192 : index
    %44 = vector.load %arg1[%c0_28, %c0_29, %c192] : memref<1x16x384xf32, #tpu.memory_space<vmem>>, vector<1x16x32xf32>
    %45 = vector.shape_cast %44 : vector<1x16x32xf32> to vector<16x32xf32>
    %c0_30 = arith.constant 0 : index
    %c0_31 = arith.constant 0 : index
    %c320 = arith.constant 320 : index
    %46 = vector.load %arg1[%c0_30, %c0_31, %c320] : memref<1x16x384xf32, #tpu.memory_space<vmem>>, vector<1x16x32xf32>
    %47 = vector.shape_cast %46 : vector<1x16x32xf32> to vector<16x32xf32>
    %c0_32 = arith.constant 0 : index
    %c2 = arith.constant 2 : index
    %c0_33 = arith.constant 0 : index
    %c0_34 = arith.constant 0 : index
    %48 = vector.load %arg2[%c0_32, %c2, %c0_33, %c0_34] : memref<1x4x16x16xf32, #tpu.memory_space<vmem>>, vector<1x1x16x16xf32>
    %49 = vector.shape_cast %48 : vector<1x1x16x16xf32> to vector<16x16xf32>
    %cst_35 = arith.constant dense<0.000000e+00> : vector<16x16xf32>
    %50 = tpu.matmul %43, %45, %cst_35 {dimension_numbers = #tpu.dot_dimension_numbers<[1], [1], [0], [0], [0, 0, 1, 0], [], []>} : vector<16x32xf32>, vector<16x32xf32>, vector<16x16xf32> -> vector<16x16xf32>
    %51 = arith.addf %50, %49 : vector<16x16xf32>
    %cst_36 = arith.constant dense<0xFF800000> : vector<16xf32>
    %52 = vector.multi_reduction <maximumf>, %51, %cst_36 [1] : vector<16x16xf32> to vector<16xf32>
    %53 = vector.shape_cast %52 : vector<16xf32> to vector<16x1xf32>
    %54 = vector.broadcast %53 : vector<16x1xf32> to vector<16x16xf32>
    %55 = arith.subf %51, %54 : vector<16x16xf32>
    %56 = math.exp %55 : vector<16x16xf32>
    %cst_37 = arith.constant dense<0.000000e+00> : vector<16xf32>
    %57 = vector.multi_reduction <add>, %56, %cst_37 [1] : vector<16x16xf32> to vector<16xf32>
    %58 = vector.shape_cast %57 : vector<16xf32> to vector<16x1xf32>
    %59 = tpu.reciprocal %58 {approx = true} : vector<16x1xf32> -> vector<16x1xf32>
    %60 = vector.broadcast %59 : vector<16x1xf32> to vector<16x16xf32>
    %61 = arith.mulf %56, %60 : vector<16x16xf32>
    %cst_38 = arith.constant dense<0.000000e+00> : vector<16x32xf32>
    %62 = tpu.matmul %61, %47, %cst_38 {dimension_numbers = #tpu.dot_dimension_numbers<[1], [0], [0], [1], [0, 0, 1, 1], [], []>} : vector<16x16xf32>, vector<16x32xf32>, vector<16x32xf32> -> vector<16x32xf32>
    %c0_39 = arith.constant 0 : index
    %c0_40 = arith.constant 0 : index
    %c96 = arith.constant 96 : index
    %63 = vector.load %arg1[%c0_39, %c0_40, %c96] : memref<1x16x384xf32, #tpu.memory_space<vmem>>, vector<1x16x32xf32>
    %64 = vector.shape_cast %63 : vector<1x16x32xf32> to vector<16x32xf32>
    %c0_41 = arith.constant 0 : index
    %c0_42 = arith.constant 0 : index
    %c224 = arith.constant 224 : index
    %65 = vector.load %arg1[%c0_41, %c0_42, %c224] : memref<1x16x384xf32, #tpu.memory_space<vmem>>, vector<1x16x32xf32>
    %66 = vector.shape_cast %65 : vector<1x16x32xf32> to vector<16x32xf32>
    %c0_43 = arith.constant 0 : index
    %c0_44 = arith.constant 0 : index
    %c352 = arith.constant 352 : index
    %67 = vector.load %arg1[%c0_43, %c0_44, %c352] : memref<1x16x384xf32, #tpu.memory_space<vmem>>, vector<1x16x32xf32>
    %68 = vector.shape_cast %67 : vector<1x16x32xf32> to vector<16x32xf32>
    %c0_45 = arith.constant 0 : index
    %c3 = arith.constant 3 : index
    %c0_46 = arith.constant 0 : index
    %c0_47 = arith.constant 0 : index
    %69 = vector.load %arg2[%c0_45, %c3, %c0_46, %c0_47] : memref<1x4x16x16xf32, #tpu.memory_space<vmem>>, vector<1x1x16x16xf32>
    %70 = vector.shape_cast %69 : vector<1x1x16x16xf32> to vector<16x16xf32>
    %cst_48 = arith.constant dense<0.000000e+00> : vector<16x16xf32>
    %71 = tpu.matmul %64, %66, %cst_48 {dimension_numbers = #tpu.dot_dimension_numbers<[1], [1], [0], [0], [0, 0, 1, 0], [], []>} : vector<16x32xf32>, vector<16x32xf32>, vector<16x16xf32> -> vector<16x16xf32>
    %72 = arith.addf %71, %70 : vector<16x16xf32>
    %cst_49 = arith.constant dense<0xFF800000> : vector<16xf32>
    %73 = vector.multi_reduction <maximumf>, %72, %cst_49 [1] : vector<16x16xf32> to vector<16xf32>
    %74 = vector.shape_cast %73 : vector<16xf32> to vector<16x1xf32>
    %75 = vector.broadcast %74 : vector<16x1xf32> to vector<16x16xf32>
    %76 = arith.subf %72, %75 : vector<16x16xf32>
    %77 = math.exp %76 : vector<16x16xf32>
    %cst_50 = arith.constant dense<0.000000e+00> : vector<16xf32>
    %78 = vector.multi_reduction <add>, %77, %cst_50 [1] : vector<16x16xf32> to vector<16xf32>
    %79 = vector.shape_cast %78 : vector<16xf32> to vector<16x1xf32>
    %80 = tpu.reciprocal %79 {approx = true} : vector<16x1xf32> -> vector<16x1xf32>
    %81 = vector.broadcast %80 : vector<16x1xf32> to vector<16x16xf32>
    %82 = arith.mulf %77, %81 : vector<16x16xf32>
    %cst_51 = arith.constant dense<0.000000e+00> : vector<16x32xf32>
    %83 = tpu.matmul %82, %68, %cst_51 {dimension_numbers = #tpu.dot_dimension_numbers<[1], [0], [0], [1], [0, 0, 1, 1], [], []>} : vector<16x16xf32>, vector<16x32xf32>, vector<16x32xf32> -> vector<16x32xf32>
    %84 = tpu.concatenate %20, %41, %62, %83 in 1 : vector<16x32xf32>, vector<16x32xf32>, vector<16x32xf32>, vector<16x32xf32> -> vector<16x128xf32>
    %c0_52 = arith.constant 0 : index
    %c0_53 = arith.constant 0 : index
    %c0_54 = arith.constant 0 : index
    %85 = vector.load %arg3[%c0_52, %c0_53, %c0_54] : memref<1x16x128xf32, #tpu.memory_space<vmem>>, vector<1x16x128xf32>
    %86 = vector.shape_cast %85 : vector<1x16x128xf32> to vector<16x128xf32>
    %87 = vector.shape_cast %84 : vector<16x128xf32> to vector<1x16x128xf32>
    tpu.vector_store %arg3[%c0_52, %c0_53, %c0_54], %87 {strides = array<i32>} : memref<1x16x128xf32, #tpu.memory_space<vmem>>, vector<1x16x128xf32>,
    return
  }
  func.func @transform_0(%arg0: i32) -> (i32, i32, i32) {
    %c0_i32 = arith.constant 0 : i32
    %c0_i32_0 = arith.constant 0 : i32
    %c0_i32_1 = arith.constant 0 : i32
    return %arg0, %c0_i32, %c0_i32_0 : i32, i32, i32
  }
  func.func @transform_1(%arg0: i32) -> (i32, i32, i32, i32) {
    %c0_i32 = arith.constant 0 : i32
    %c0_i32_0 = arith.constant 0 : i32
    %c0_i32_1 = arith.constant 0 : i32
    %c0_i32_2 = arith.constant 0 : i32
    %c0_i32_3 = arith.constant 0 : i32
    return %c0_i32, %c0_i32_0, %c0_i32_1, %c0_i32_2 : i32, i32, i32, i32
  }
  func.func @transform_2(%arg0: i32) -> (i32, i32, i32) {
    %c0_i32 = arith.constant 0 : i32
    %c0_i32_0 = arith.constant 0 : i32
    %c0_i32_1 = arith.constant 0 : i32
    return %arg0, %c0_i32, %c0_i32_0 : i32, i32, i32
  }
}

module attributes {stable_mosaic.version = 11 : i64} {
  func.func @_linear_kernel(%arg0: i32, %arg1: memref<32x128xf32, #tpu.memory_space<vmem>>, %arg2: memref<128x128xf32, #tpu.memory_space<vmem>>, %arg3: memref<32x128xf32, #tpu.memory_space<vmem>>) attributes {dimension_semantics = [#tpu.dimension_semantics<parallel>], iteration_bounds = array<i64: 1>, scalar_prefetch = 0 : i64, scratch_operands = 0 : i64, tpu.core_type = #tpu.core_type<tc>, window_params = [{transform_indices = @transform_0, window_bounds = array<i64: 32, 128>}, {pipeline_mode = #tpu.pipeline_mode<synchronous>, transform_indices = @transform_1, window_bounds = array<i64: 128, 128>}, {transform_indices = @transform_2, window_bounds = array<i64: 32, 128>}]} {
    %c0 = arith.constant 0 : index
    %c0_0 = arith.constant 0 : index
    %0 = vector.load %arg1[%c0, %c0_0] : memref<32x128xf32, #tpu.memory_space<vmem>>, vector<32x128xf32>
    %c0_1 = arith.constant 0 : index
    %c0_2 = arith.constant 0 : index
    %1 = vector.load %arg2[%c0_1, %c0_2] : memref<128x128xf32, #tpu.memory_space<vmem>>, vector<128x128xf32>
    %cst = arith.constant dense<0.000000e+00> : vector<32x128xf32>
    %2 = tpu.matmul %0, %1, %cst {dimension_numbers = #tpu.dot_dimension_numbers<[1], [0], [0], [1], [0, 0, 1, 1], [], []>} : vector<32x128xf32>, vector<128x128xf32>, vector<32x128xf32> -> vector<32x128xf32>
    %c0_3 = arith.constant 0 : index
    %c0_4 = arith.constant 0 : index
    %3 = vector.load %arg3[%c0_3, %c0_4] : memref<32x128xf32, #tpu.memory_space<vmem>>, vector<32x128xf32>
    tpu.vector_store %arg3[%c0_3, %c0_4], %2 {strides = array<i32>} : memref<32x128xf32, #tpu.memory_space<vmem>>, vector<32x128xf32>,
    return
  }
  func.func @transform_0(%arg0: i32) -> (i32, i32) {
    %c0_i32 = arith.constant 0 : i32
    %c0_i32_0 = arith.constant 0 : i32
    return %arg0, %c0_i32 : i32, i32
  }
  func.func @transform_1(%arg0: i32) -> (i32, i32) {
    %c0_i32 = arith.constant 0 : i32
    %c0_i32_0 = arith.constant 0 : i32
    %c0_i32_1 = arith.constant 0 : i32
    return %c0_i32, %c0_i32_0 : i32, i32
  }
  func.func @transform_2(%arg0: i32) -> (i32, i32) {
    %c0_i32 = arith.constant 0 : i32
    %c0_i32_0 = arith.constant 0 : i32
    return %arg0, %c0_i32 : i32, i32
  }
}

</mosaic_0001>

<llo_original>
// kernel: t5_attention_forward.3
$region0: #{t5_attention_forward.3}
  #allocation0 [shape = 'u32[]', space=smem, size = 0x4, offset = 0x4, fixed_abs, tag = 'smem constant byte address 0x4 - core index']
  #allocation1 [shape = 'u32[144,128]{1,0:T(1,128)}', space=vmem, size = 0x12000, scoped, tag = 'internal scratch']
  %s0 = inlined_call_operand.vmem [shape: f32[32,128], index: 0, kind: input, shape index: {}]
  %s1 = inlined_call_operand.vmem [shape: f32[128,384], index: 1, kind: input, shape index: {}]
  %s2 = inlined_call_operand.vmem [shape: f32[32,384], index: 2, kind: output, shape index: {}]
  %s3 = sld [smem:[#allocation0]]
  $region18: #{t5_attention_forward.3} parent=0
    _
  %s5 = ssub.s32 1, %s3
  %s6 = scalar_select 0, %s5, %s3
  // Predicated region
  $region2: #{t5_attention_forward.3} parent=0 // pred_check
    _
  $region3: #{t5_attention_forward.3} parent=0 // pred_check_branch
    %8 = sbr.rel (0) target = $region5
  $region4: #{t5_attention_forward.3} parent=0 // pred_region
    _
  $region5: #{t5_attention_forward.3} parent=0 // pred_fallthru
    _
  // Predicated region
  $region6: #{t5_attention_forward.3} parent=0 // pred_check
    _
  $region7: #{t5_attention_forward.3} parent=0 // pred_check_branch
    %10 = sbr.rel (0) target = $region9
  $region8: #{t5_attention_forward.3} parent=0 // pred_region
    _
  $region9: #{t5_attention_forward.3} parent=0 // pred_fallthru
    _
  %v11 = vld [vmem:[%s0] sm:$0xff]
  %v12 = vld [vmem:[%s0 + $0x8] sm:$0xff]
  %v13 = vld [vmem:[%s0 + $0x10] sm:$0xff]
  %v14 = vld [vmem:[%s0 + $0x18] sm:$0xff]
  %v15 = vld [vmem:[%s1] sm:$0xff]
  %v16 = vld [vmem:[%s1 + $0x8] sm:$0xff]
  %v17 = vld [vmem:[%s1 + $0x10] sm:$0xff]
  %v18 = vld [vmem:[%s1 + $0x18] sm:$0xff]
  %v19 = vld [vmem:[%s1 + $0x20] sm:$0xff]
  %v20 = vld [vmem:[%s1 + $0x28] sm:$0xff]
  %v21 = vld [vmem:[%s1 + $0x30] sm:$0xff]
  %v22 = vld [vmem:[%s1 + $0x38] sm:$0xff]
  %v23 = vld [vmem:[%s1 + $0x40] sm:$0xff]
  %v24 = vld [vmem:[%s1 + $0x48] sm:$0xff]
  %v25 = vld [vmem:[%s1 + $0x50] sm:$0xff]
  %v26 = vld [vmem:[%s1 + $0x58] sm:$0xff]
  %v27 = vld [vmem:[%s1 + $0x60] sm:$0xff]
  %v28 = vld [vmem:[%s1 + $0x68] sm:$0xff]
  %v29 = vld [vmem:[%s1 + $0x70] sm:$0xff]
  %v30 = vld [vmem:[%s1 + $0x78] sm:$0xff]
  %v31 = vld [vmem:[%s1 + $0x80] sm:$0xff]
  %v32 = vld [vmem:[%s1 + $0x88] sm:$0xff]
  %v33 = vld [vmem:[%s1 + $0x90] sm:$0xff]
  %v34 = vld [vmem:[%s1 + $0x98] sm:$0xff]
  %v35 = vld [vmem:[%s1 + $0xa0] sm:$0xff]
  %v36 = vld [vmem:[%s1 + $0xa8] sm:$0xff]
  %v37 = vld [vmem:[%s1 + $0xb0] sm:$0xff]
  %v38 = vld [vmem:[%s1 + $0xb8] sm:$0xff]
  %v39 = vld [vmem:[%s1 + $0xc0] sm:$0xff]
  %v40 = vld [vmem:[%s1 + $0xc8] sm:$0xff]
  %v41 = vld [vmem:[%s1 + $0xd0] sm:$0xff]
  %v42 = vld [vmem:[%s1 + $0xd8] sm:$0xff]
  %v43 = vld [vmem:[%s1 + $0xe0] sm:$0xff]
  %v44 = vld [vmem:[%s1 + $0xe8] sm:$0xff]
  %v45 = vld [vmem:[%s1 + $0xf0] sm:$0xff]
  %v46 = vld [vmem:[%s1 + $0xf8] sm:$0xff]
  %v47 = vld [vmem:[%s1 + $0x100] sm:$0xff]
  %v48 = vld [vmem:[%s1 + $0x108] sm:$0xff]
  %v49 = vld [vmem:[%s1 + $0x110] sm:$0xff]
  %v50 = vld [vmem:[%s1 + $0x118] sm:$0xff]
  %v51 = vld [vmem:[%s1 + $0x120] sm:$0xff]
  %v52 = vld [vmem:[%s1 + $0x128] sm:$0xff]
  %v53 = vld [vmem:[%s1 + $0x130] sm:$0xff]
  %v54 = vld [vmem:[%s1 + $0x138] sm:$0xff]
  %v55 = vld [vmem:[%s1 + $0x140] sm:$0xff]
  %v56 = vld [vmem:[%s1 + $0x148] sm:$0xff]
  %v57 = vld [vmem:[%s1 + $0x150] sm:$0xff]
  %v58 = vld [vmem:[%s1 + $0x158] sm:$0xff]
  %v59 = vld [vmem:[%s1 + $0x160] sm:$0xff]
  %v60 = vld [vmem:[%s1 + $0x168] sm:$0xff]
  %v61 = vld [vmem:[%s1 + $0x170] sm:$0xff]
  %v62 = vld [vmem:[%s1 + $0x178] sm:$0xff]
  %63 = vmatprep.subr.mxu0 %v16
  %64 = vmatpush1.msra.mxu0 %v15
  %65 = vmatprep.subr.mxu0 %v19
  %66 = vmatpush1.msra.mxu0 %v18
  %67 = vmatprep.subr.mxu0 %v22
  %68 = vmatpush1.msra.mxu0 %v21
  %69 = vmatprep.subr.mxu0 %v25
  %70 = vmatpush1.msra.mxu0 %v24
  %71 = vmatprep.subr.mxu0 %v28
  %72 = vmatpush1.msra.mxu0 %v27
  %73 = vmatprep.subr.mxu0 %v31
  %74 = vmatpush1.msra.mxu0 %v30
  %75 = vmatprep.subr.mxu0 %v34
  %76 = vmatpush1.msra.mxu0 %v33
  %77 = vmatprep.subr.mxu0 %v37
  %78 = vmatpush1.msra.mxu0 %v36
  %79 = vmatprep.subr.mxu0 %v40
  %80 = vmatpush1.msra.mxu0 %v39
  %81 = vmatprep.subr.mxu0 %v43
  %82 = vmatpush1.msra.mxu0 %v42
  %83 = vmatprep.subr.mxu0 %v46
  %84 = vmatpush1.msra.mxu0 %v45
  %85 = vmatprep.subr.mxu0 %v49
  %86 = vmatpush1.msra.mxu0 %v48
  %87 = vmatprep.subr.mxu0 %v52
  %88 = vmatpush1.msra.mxu0 %v51
  %89 = vmatprep.subr.mxu0 %v55
  %90 = vmatpush1.msra.mxu0 %v54
  %91 = vmatprep.subr.mxu0 %v58
  %92 = vmatpush1.msra.mxu0 %v57
  %93 = vmatprep.subr.mxu0 %v61
  %94 = vmatpush1.msra.mxu0 %v60
  %95 = vmatprep.subr.mxu0 0.0
  %96 = vmatpush1.msra.mxu0 0.0
  %97 = vmatprep.subr.mxu0 0.0
  %98 = vmatpush1.msra.mxu0 0.0
  %99 = vmatprep.subr.mxu0 0.0
  %100 = vmatpush1.msra.mxu0 0.0
  %101 = vmatprep.subr.mxu0 0.0
  %102 = vmatpush1.msra.mxu0 0.0
  %103 = vmatprep.subr.mxu0 0.0
  %104 = vmatpush1.msra.mxu0 0.0
  %105 = vmatprep.subr.mxu0 0.0
  %106 = vmatpush1.msra.mxu0 0.0
  %107 = vmatprep.subr.mxu0 0.0
  %108 = vmatpush1.msra.mxu0 0.0
  %109 = vmatprep.subr.mxu0 0.0
  %110 = vmatpush1.msra.mxu0 0.0
  %111 = vmatprep.subr.mxu0 0.0
  %112 = vmatpush1.msra.mxu0 0.0
  %113 = vmatprep.subr.mxu0 0.0
  %114 = vmatpush1.msra.mxu0 0.0
  %115 = vmatprep.subr.mxu0 0.0
  %116 = vmatpush1.msra.mxu0 0.0
  %117 = vmatprep.subr.mxu0 0.0
  %118 = vmatpush1.msra.mxu0 0.0
  %119 = vmatprep.subr.mxu0 0.0
  %120 = vmatpush1.msra.mxu0 0.0
  %121 = vmatprep.subr.mxu0 0.0
  %122 = vmatpush1.msra.mxu0 0.0
  %123 = vmatprep.subr.mxu0 0.0
  %124 = vmatpush1.msra.mxu0 0.0
  %125 = vmatprep.subr.mxu0 0.0
  %126 = vmatpush1.msra.mxu0 0.0
  %127 = vmatprep.mubr.f32.mxu0 0.0
  %128 = vmatmul.mubr.f32.gmra.mrb[0].mxu0 %v11
  %v129 = vpop.f32.mrb[0].mxu0
  %v130 = vadd.f32 0.0, %v129
  %v131 = vpop.f32.mrb[0].mxu0
  %v132 = vadd.f32 0.0, %v131
  %133 = vmatprep.mubr.f32.mxu0 0.0
  %134 = vmatmul.mubr.f32.gmra.mrb[0].mxu0 %v12
  %v135 = vpop.f32.mrb[0].mxu0
  %v136 = vadd.f32 0.0, %v135
  %v137 = vpop.f32.mrb[0].mxu0
  %v138 = vadd.f32 0.0, %v137
  %139 = vmatprep.mubr.f32.mxu0 0.0
  %140 = vmatmul.mubr.f32.gmra.mrb[0].mxu0 %v13
  %v141 = vpop.f32.mrb[0].mxu0
  %v142 = vadd.f32 0.0, %v141
  %v143 = vpop.f32.mrb[0].mxu0
  %v144 = vadd.f32 0.0, %v143
  %145 = vmatprep.mubr.f32.mxu0 0.0
  %146 = vmatmul.mubr.f32.gmra.mrb[0].mxu0 %v14
  %v147 = vpop.f32.mrb[0].mxu0
  %v148 = vadd.f32 0.0, %v147
  %v149 = vpop.f32.mrb[0].mxu0
  %v150 = vadd.f32 0.0, %v149
  %151 = vdwg.mxu0
  %152 = vmatprep.subr.mxu0 0.0
  %153 = vmatpush1.msra.mxu0 %v17
  %154 = vmatprep.subr.mxu0 0.0
  %155 = vmatpush1.msra.mxu0 %v20
  %156 = vmatprep.subr.mxu0 0.0
  %157 = vmatpush1.msra.mxu0 %v23
  %158 = vmatprep.subr.mxu0 0.0
  %159 = vmatpush1.msra.mxu0 %v26
  %160 = vmatprep.subr.mxu0 0.0
  %161 = vmatpush1.msra.mxu0 %v29
  %162 = vmatprep.subr.mxu0 0.0
  %163 = vmatpush1.msra.mxu0 %v32
  %164 = vmatprep.subr.mxu0 0.0
  %165 = vmatpush1.msra.mxu0 %v35
  %166 = vmatprep.subr.mxu0 0.0
  %167 = vmatpush1.msra.mxu0 %v38
  %168 = vmatprep.subr.mxu0 0.0
  %169 = vmatpush1.msra.mxu0 %v41
  %170 = vmatprep.subr.mxu0 0.0
  %171 = vmatpush1.msra.mxu0 %v44
  %172 = vmatprep.subr.mxu0 0.0
  %173 = vmatpush1.msra.mxu0 %v47
  %174 = vmatprep.subr.mxu0 0.0
  %175 = vmatpush1.msra.mxu0 %v50
  %176 = vmatprep.subr.mxu0 0.0
  %177 = vmatpush1.msra.mxu0 %v53
  %178 = vmatprep.subr.mxu0 0.0
  %179 = vmatpush1.msra.mxu0 %v56
  %180 = vmatprep.subr.mxu0 0.0
  %181 = vmatpush1.msra.mxu0 %v59
  %182 = vmatprep.subr.mxu0 0.0
  %183 = vmatpush1.msra.mxu0 %v62
  %184 = vmatprep.subr.mxu0 0.0
  %185 = vmatpush1.msra.mxu0 0.0
  %186 = vmatprep.subr.mxu0 0.0
  %187 = vmatpush1.msra.mxu0 0.0
  %188 = vmatprep.subr.mxu0 0.0
  %189 = vmatpush1.msra.mxu0 0.0
  %190 = vmatprep.subr.mxu0 0.0
  %191 = vmatpush1.msra.mxu0 0.0
  %192 = vmatprep.subr.mxu0 0.0
  %193 = vmatpush1.msra.mxu0 0.0
  %194 = vmatprep.subr.mxu0 0.0
  %195 = vmatpush1.msra.mxu0 0.0
  %196 = vmatprep.subr.mxu0 0.0
  %197 = vmatpush1.msra.mxu0 0.0
  %198 = vmatprep.subr.mxu0 0.0
  %199 = vmatpush1.msra.mxu0 0.0
  %200 = vmatprep.subr.mxu0 0.0
  %201 = vmatpush1.msra.mxu0 0.0
  %202 = vmatprep.subr.mxu0 0.0
  %203 = vmatpush1.msra.mxu0 0.0
  %204 = vmatprep.subr.mxu0 0.0
  %205 = vmatpush1.msra.mxu0 0.0
  %206 = vmatprep.subr.mxu0 0.0
  %207 = vmatpush1.msra.mxu0 0.0
  %208 = vmatprep.subr.mxu0 0.0
  %209 = vmatpush1.msra.mxu0 0.0
  %210 = vmatprep.subr.mxu0 0.0
  %211 = vmatpush1.msra.mxu0 0.0
  %212 = vmatprep.subr.mxu0 0.0
  %213 = vmatpush1.msra.mxu0 0.0
  %214 = vmatprep.subr.mxu0 0.0
  %215 = vmatpush1.msra.mxu0 0.0
  %216 = vmatprep.mubr.f32.mxu0 0.0
  %217 = vmatmul.mubr.f32.gmra.mrb[0].mxu0 %v11
  %v218 = vpop.f32.mrb[0].mxu0
  %v219 = vadd.f32 0.0, %v218
  %v220 = vpop.f32.mrb[0].mxu0
  %221 = vmatprep.mubr.f32.mxu0 0.0
  %222 = vmatmul.mubr.f32.gmra.mrb[0].mxu0 %v12
  %v223 = vpop.f32.mrb[0].mxu0
  %v224 = vadd.f32 0.0, %v223
  %v225 = vpop.f32.mrb[0].mxu0
  %226 = vmatprep.mubr.f32.mxu0 0.0
  %227 = vmatmul.mubr.f32.gmra.mrb[0].mxu0 %v13
  %v228 = vpop.f32.mrb[0].mxu0
  %v229 = vadd.f32 0.0, %v228
  %v230 = vpop.f32.mrb[0].mxu0
  %231 = vmatprep.mubr.f32.mxu0 0.0
  %232 = vmatmul.mubr.f32.gmra.mrb[0].mxu0 %v14
  %v233 = vpop.f32.mrb[0].mxu0
  %v234 = vadd.f32 0.0, %v233
  %v235 = vpop.f32.mrb[0].mxu0
  %236 = vdwg.mxu0
  %237 = vst [vmem:[%s2] sm:$0xff] %v130
  %238 = vst [vmem:[%s2 + $0x8] sm:$0xff] %v132
  %239 = vst [vmem:[%s2 + $0x10] sm:$0xff] %v219
  %240 = vst [vmem:[%s2 + $0x18] sm:$0xff] %v136
  %241 = vst [vmem:[%s2 + $0x20] sm:$0xff] %v138
  %242 = vst [vmem:[%s2 + $0x28] sm:$0xff] %v224
  %243 = vst [vmem:[%s2 + $0x30] sm:$0xff] %v142
  %244 = vst [vmem:[%s2 + $0x38] sm:$0xff] %v144
  %245 = vst [vmem:[%s2 + $0x40] sm:$0xff] %v229
  %246 = vst [vmem:[%s2 + $0x48] sm:$0xff] %v148
  %247 = vst [vmem:[%s2 + $0x50] sm:$0xff] %v150
  %248 = vst [vmem:[%s2 + $0x58] sm:$0xff] %v234
  // Predicated region
  $region10: #{t5_attention_forward.3} parent=0 // pred_check
    _
  $region11: #{t5_attention_forward.3} parent=0 // pred_check_branch
    %250 = sbr.rel (0) target = $region13
  $region12: #{t5_attention_forward.3} parent=0 // pred_region
    _
  $region13: #{t5_attention_forward.3} parent=0 // pred_fallthru
    _
  // Predicated region
  $region14: #{t5_attention_forward.3} parent=0 // pred_check
    _
  $region15: #{t5_attention_forward.3} parent=0 // pred_check_branch
    %252 = sbr.rel (0) target = $region17
  $region16: #{t5_attention_forward.3} parent=0 // pred_region
    _
  $region17: #{t5_attention_forward.3} parent=0 // pred_fallthru
    _

// kernel: t5_attention_forward.5
$region0: #{t5_attention_forward.5}
  #allocation0 [shape = 'u32[]', space=smem, size = 0x4, offset = 0x4, fixed_abs, tag = 'smem constant byte address 0x4 - core index']
  #allocation1 [shape = 'u32[144,128]{1,0:T(1,128)}', space=vmem, size = 0x12000, scoped, tag = 'internal scratch']
  %s0 = inlined_call_operand.vmem [shape: f32[32,128], index: 0, kind: input, shape index: {}]
  %s1 = inlined_call_operand.vmem [shape: f32[128,128], index: 1, kind: input, shape index: {}]
  %s2 = inlined_call_operand.hbm [shape: f32[32,128], index: 2, kind: output, shape index: {}]
  %s3 = sld [smem:[#allocation0]]
  $region18: #{t5_attention_forward.5} parent=0
    _
  %s5 = ssub.s32 1, %s3
  %s6 = scalar_select 0, %s5, %s3
  $region1: #{t5_attention_forward.5} parent=0
    #allocation2 [shape = 'u8[16384]{0}', space=vmem, size = 0x4000, scoped, tag = 'output window, operand 0, single buffered']
    #allocation3 [shape = 's32[1]{0}', space=sflag, size = 0x4, scoped, tag = 'scoped memory for t5_attention_forward.5']
    %7 = vsyncpa [#allocation3], 0
    // Predicated region
    $region2: #{t5_attention_forward.5} parent=1 // pred_check
      _
    $region3: #{t5_attention_forward.5} parent=1 // pred_check_branch
      %9 = sbr.rel (0) target = $region5
    $region4: #{t5_attention_forward.5} parent=1 // pred_region
      _
    $region5: #{t5_attention_forward.5} parent=1 // pred_fallthru
      _
    // Predicated region
    $region6: #{t5_attention_forward.5} parent=1 // pred_check
      _
    $region7: #{t5_attention_forward.5} parent=1 // pred_check_branch
      %11 = sbr.rel (0) target = $region9
    $region8: #{t5_attention_forward.5} parent=1 // pred_region
      _
    $region9: #{t5_attention_forward.5} parent=1 // pred_fallthru
      _
    %v12 = vld [vmem:[%s0] sm:$0xff]
    %v13 = vld [vmem:[%s0 + $0x8] sm:$0xff]
    %v14 = vld [vmem:[%s0 + $0x10] sm:$0xff]
    %v15 = vld [vmem:[%s0 + $0x18] sm:$0xff]
    %v16 = vld [vmem:[%s1] sm:$0xff]
    %v17 = vld [vmem:[%s1 + $0x8] sm:$0xff]
    %v18 = vld [vmem:[%s1 + $0x10] sm:$0xff]
    %v19 = vld [vmem:[%s1 + $0x18] sm:$0xff]
    %v20 = vld [vmem:[%s1 + $0x20] sm:$0xff]
    %v21 = vld [vmem:[%s1 + $0x28] sm:$0xff]
    %v22 = vld [vmem:[%s1 + $0x30] sm:$0xff]
    %v23 = vld [vmem:[%s1 + $0x38] sm:$0xff]
    %v24 = vld [vmem:[%s1 + $0x40] sm:$0xff]
    %v25 = vld [vmem:[%s1 + $0x48] sm:$0xff]
    %v26 = vld [vmem:[%s1 + $0x50] sm:$0xff]
    %v27 = vld [vmem:[%s1 + $0x58] sm:$0xff]
    %v28 = vld [vmem:[%s1 + $0x60] sm:$0xff]
    %v29 = vld [vmem:[%s1 + $0x68] sm:$0xff]
    %v30 = vld [vmem:[%s1 + $0x70] sm:$0xff]
    %v31 = vld [vmem:[%s1 + $0x78] sm:$0xff]
    %32 = vmatprep.subr.mxu0 0.0
    %33 = vmatpush1.msra.mxu0 %v16
    %34 = vmatprep.subr.mxu0 0.0
    %35 = vmatpush1.msra.mxu0 %v17
    %36 = vmatprep.subr.mxu0 0.0
    %37 = vmatpush1.msra.mxu0 %v18
    %38 = vmatprep.subr.mxu0 0.0
    %39 = vmatpush1.msra.mxu0 %v19
    %40 = vmatprep.subr.mxu0 0.0
    %41 = vmatpush1.msra.mxu0 %v20
    %42 = vmatprep.subr.mxu0 0.0
    %43 = vmatpush1.msra.mxu0 %v21
    %44 = vmatprep.subr.mxu0 0.0
    %45 = vmatpush1.msra.mxu0 %v22
    %46 = vmatprep.subr.mxu0 0.0
    %47 = vmatpush1.msra.mxu0 %v23
    %48 = vmatprep.subr.mxu0 0.0
    %49 = vmatpush1.msra.mxu0 %v24
    %50 = vmatprep.subr.mxu0 0.0
    %51 = vmatpush1.msra.mxu0 %v25
    %52 = vmatprep.subr.mxu0 0.0
    %53 = vmatpush1.msra.mxu0 %v26
    %54 = vmatprep.subr.mxu0 0.0
    %55 = vmatpush1.msra.mxu0 %v27
    %56 = vmatprep.subr.mxu0 0.0
    %57 = vmatpush1.msra.mxu0 %v28
    %58 = vmatprep.subr.mxu0 0.0
    %59 = vmatpush1.msra.mxu0 %v29
    %60 = vmatprep.subr.mxu0 0.0
    %61 = vmatpush1.msra.mxu0 %v30
    %62 = vmatprep.subr.mxu0 0.0
    %63 = vmatpush1.msra.mxu0 %v31
    %64 = vmatprep.subr.mxu0 0.0
    %65 = vmatpush1.msra.mxu0 0.0
    %66 = vmatprep.subr.mxu0 0.0
    %67 = vmatpush1.msra.mxu0 0.0
    %68 = vmatprep.subr.mxu0 0.0
    %69 = vmatpush1.msra.mxu0 0.0
    %70 = vmatprep.subr.mxu0 0.0
    %71 = vmatpush1.msra.mxu0 0.0
    %72 = vmatprep.subr.mxu0 0.0
    %73 = vmatpush1.msra.mxu0 0.0
    %74 = vmatprep.subr.mxu0 0.0
    %75 = vmatpush1.msra.mxu0 0.0
    %76 = vmatprep.subr.mxu0 0.0
    %77 = vmatpush1.msra.mxu0 0.0
    %78 = vmatprep.subr.mxu0 0.0
    %79 = vmatpush1.msra.mxu0 0.0
    %80 = vmatprep.subr.mxu0 0.0
    %81 = vmatpush1.msra.mxu0 0.0
    %82 = vmatprep.subr.mxu0 0.0
    %83 = vmatpush1.msra.mxu0 0.0
    %84 = vmatprep.subr.mxu0 0.0
    %85 = vmatpush1.msra.mxu0 0.0
    %86 = vmatprep.subr.mxu0 0.0
    %87 = vmatpush1.msra.mxu0 0.0
    %88 = vmatprep.subr.mxu0 0.0
    %89 = vmatpush1.msra.mxu0 0.0
    %90 = vmatprep.subr.mxu0 0.0
    %91 = vmatpush1.msra.mxu0 0.0
    %92 = vmatprep.subr.mxu0 0.0
    %93 = vmatpush1.msra.mxu0 0.0
    %94 = vmatprep.subr.mxu0 0.0
    %95 = vmatpush1.msra.mxu0 0.0
    %96 = vmatprep.mubr.f32.mxu0 0.0
    %97 = vmatmul.mubr.f32.gmra.mrb[0].mxu0 %v12
    %v98 = vpop.f32.mrb[0].mxu0
    %v99 = vadd.f32 0.0, %v98
    %v100 = vpop.f32.mrb[0].mxu0
    %101 = vmatprep.mubr.f32.mxu0 0.0
    %102 = vmatmul.mubr.f32.gmra.mrb[0].mxu0 %v13
    %v103 = vpop.f32.mrb[0].mxu0
    %v104 = vadd.f32 0.0, %v103
    %v105 = vpop.f32.mrb[0].mxu0
    %106 = vmatprep.mubr.f32.mxu0 0.0
    %107 = vmatmul.mubr.f32.gmra.mrb[0].mxu0 %v14
    %v108 = vpop.f32.mrb[0].mxu0
    %v109 = vadd.f32 0.0, %v108
    %v110 = vpop.f32.mrb[0].mxu0
    %111 = vmatprep.mubr.f32.mxu0 0.0
    %112 = vmatmul.mubr.f32.gmra.mrb[0].mxu0 %v15
    %v113 = vpop.f32.mrb[0].mxu0
    %v114 = vadd.f32 0.0, %v113
    %v115 = vpop.f32.mrb[0].mxu0
    %116 = vdwg.mxu0
    %117 = vst [vmem:[#allocation2] sm:$0xff] %v99
    %118 = vst [vmem:[#allocation2 + $0x8] sm:$0xff] %v104
    %119 = vst [vmem:[#allocation2 + $0x10] sm:$0xff] %v109
    %120 = vst [vmem:[#allocation2 + $0x18] sm:$0xff] %v114
    // Predicated region
    $region10: #{t5_attention_forward.5} parent=1 // pred_check
      _
    $region11: #{t5_attention_forward.5} parent=1 // pred_check_branch
      %122 = sbr.rel (0) target = $region13
    $region12: #{t5_attention_forward.5} parent=1 // pred_region
      %s124 = ssub.s32 512, 512
      %125 = vsyncadd [#allocation3], %s124
      %s126 = sshll.u32 [#allocation2], 4
      %s127 = int_to_ptr.vmem [resolvable:$true] %s126
      %132 = dma.vmem_to_hbm [thread:$0]  %s127, 512, %s2, [#allocation3], 128, 128, 8
    $region13: #{t5_attention_forward.5} parent=1 // pred_fallthru
      _
    // Predicated region
    $region14: #{t5_attention_forward.5} parent=1 // pred_check
      _
    $region15: #{t5_attention_forward.5} parent=1 // pred_check_branch
      %134 = sbr.rel (0) target = $region17
    $region16: #{t5_attention_forward.5} parent=1 // pred_region
      %135 = dma.done [#allocation3], 512
    $region17: #{t5_attention_forward.5} parent=1 // pred_fallthru
      _
    %136 = vsyncpa [#allocation3], 1

// kernel: t5_attention_forward.4
$region0: #{t5_attention_forward.4}
  #allocation0 [shape = 'u32[]', space=smem, size = 0x4, offset = 0x4, fixed_abs, tag = 'smem constant byte address 0x4 - core index']
  #allocation1 [shape = 'u32[144,128]{1,0:T(1,128)}', space=vmem, size = 0x12000, scoped, tag = 'internal scratch']
  %s0 = inlined_call_operand.vmem [shape: f32[2,16,384], index: 0, kind: input, shape index: {}]
  %s1 = inlined_call_operand.vmem [shape: f32[1,4,16,16], index: 1, kind: input, shape index: {}]
  %s2 = inlined_call_operand.vmem [shape: f32[2,16,128], index: 2, kind: output, shape index: {}]
  %s3 = sld [smem:[#allocation0]]
  $region41: #{t5_attention_forward.4} parent=0
    _
  %s5 = ssub.s32 1, %s3
  %s6 = scalar_select 0, %s5, %s3
  loop: start=0, step=1, limit=4
  $region2: #{t5_attention_forward.4} parent=0 // loop_pre_header
    _
  $region3: #{t5_attention_forward.4} parent=0 // loop_header
    %s8 = sphi 0, %s12
    %p9 = scmp.ge.s32.totalorder %s8, 4
    %s18 = sphi 0, %s20
    %s21 = sphi 0, %s18
    %s22 = sphi 0, %s21
    %s38 = sphi 0, %s22
    %s42 = sphi 0, %s42
    %s44 = sphi 0, %s42
    %s45 = sphi 0, %s44
    %s59 = sphi 0, %s45
    %s65 = sphi 0, %s67
    %s68 = sphi 0, %s65
    %s69 = sphi 0, %s68
    %s85 = sphi 0, %s69
  $region4: #{t5_attention_forward.4} parent=0 // loop_header_branch
    %11 = sbr.rel (%p9) target = $region8
  $region5: #{t5_attention_forward.4} parent=0 // loop_body
    %s13 = ssub.s32 %s8, 1
    %s14 = ssub.s32 %s8, 2
    %s15 = sadd.s32 %s8, 1
    %s16 = ssub.s32 %s8, %s15
    %p17 = scmp.eq.s32.totalorder %s16, 0
    %s19 = sadd.s32 %s18, 1
    %s20 = scalar_select %p17, %s18, %s19
    %p23 = pneg %p17
    %p24 = scmp.eq.s32.totalorder %s8, 1
    %p25 = por %p23, %p24
    %p26 = scmp.ne.s32.totalorder %s18, %s21
    %p27 = scmp.eq.s32.totalorder %s8, 0
    %p28 = por %p26, %p27
    %p29 = scmp.ne.s32.totalorder %s18, %s21
    %p30 = scmp.eq.s32.totalorder %s13, 1
    %p31 = por %p29, %p30
    %p32 = scmp.ne.s32.totalorder %s21, %s22
    %p33 = scmp.eq.s32.totalorder %s13, 0
    %p34 = por %p32, %p33
    %p35 = scmp.ne.s32.totalorder %s21, %s22
    %p36 = scmp.eq.s32.totalorder %s14, 1
    %p37 = por %p35, %p36
    %p39 = scmp.ne.s32.totalorder %s22, %s38
    %p40 = scmp.eq.s32.totalorder %s14, 0
    %p41 = por %p39, %p40
    %s43 = sadd.s32 %s42, 1
    %p46 = scmp.eq.s32.totalorder %s8, 1
    %p47 = scmp.ne.s32.totalorder %s42, %s44
    %p48 = scmp.eq.s32.totalorder %s8, 0
    %p49 = por %p47, %p48
    %p50 = scmp.ne.s32.totalorder %s42, %s44
    %p51 = scmp.eq.s32.totalorder %s13, 1
    %p52 = por %p50, %p51
    %p53 = scmp.ne.s32.totalorder %s44, %s45
    %p54 = scmp.eq.s32.totalorder %s13, 0
    %p55 = por %p53, %p54
    %p56 = scmp.ne.s32.totalorder %s44, %s45
    %p57 = scmp.eq.s32.totalorder %s14, 1
    %p58 = por %p56, %p57
    %p60 = scmp.ne.s32.totalorder %s45, %s59
    %p61 = scmp.eq.s32.totalorder %s14, 0
    %p62 = por %p60, %p61
    %s63 = ssub.s32 %s8, %s15
    %p64 = scmp.eq.s32.totalorder %s63, 0
    %s66 = sadd.s32 %s65, 1
    %s67 = scalar_select %p64, %s65, %s66
    %p70 = pneg %p64
    %p71 = scmp.eq.s32.totalorder %s8, 1
    %p72 = por %p70, %p71
    %p73 = scmp.ne.s32.totalorder %s65, %s68
    %p74 = scmp.eq.s32.totalorder %s8, 0
    %p75 = por %p73, %p74
    %p76 = scmp.ne.s32.totalorder %s65, %s68
    %p77 = scmp.eq.s32.totalorder %s13, 1
    %p78 = por %p76, %p77
    %p79 = scmp.ne.s32.totalorder %s68, %s69
    %p80 = scmp.eq.s32.totalorder %s13, 0
    %p81 = por %p79, %p80
    %p82 = scmp.ne.s32.totalorder %s68, %s69
    %p83 = scmp.eq.s32.totalorder %s14, 1
    %p84 = por %p82, %p83
    %p86 = scmp.ne.s32.totalorder %s69, %s85
    %p87 = scmp.eq.s32.totalorder %s14, 0
    %p88 = por %p86, %p87
    %p89 = scmp.le.s32.totalorder 1, %s8
    %p90 = scmp.lt.s32.totalorder %s8, 3
    %p91 = pnand %p89, %p90
    %p92 = pneg %p91
    // Predicated region
    $region9: #{t5_attention_forward.4} parent=5 // pred_check
      _
    $region10: #{t5_attention_forward.4} parent=5 // pred_check_branch
      %94 = sbr.rel (%p91) target = $region12
    $region11: #{t5_attention_forward.4} parent=5 // pred_region
      %s95 = ssub.s32 %s8, 1
      // Predicated region
      $region13: #{t5_attention_forward.4} parent=11 // pred_check
        %p96 = pneg %p55
      $region14: #{t5_attention_forward.4} parent=11 // pred_check_branch
        %98 = sbr.rel (%p96) target = $region16
      $region15: #{t5_attention_forward.4} parent=11 // pred_region
        _
      $region16: #{t5_attention_forward.4} parent=11 // pred_fallthru
        _
    $region12: #{t5_attention_forward.4} parent=5 // pred_fallthru
      _
    %p99 = scmp.lt.s32.totalorder %s8, 2
    // Predicated region
    $region17: #{t5_attention_forward.4} parent=5 // pred_check
      %p100 = pneg %p99
    $region18: #{t5_attention_forward.4} parent=5 // pred_check_branch
      %102 = sbr.rel (%p100) target = $region20
    $region19: #{t5_attention_forward.4} parent=5 // pred_region
      // Predicated region
      $region21: #{t5_attention_forward.4} parent=19 // pred_check
        %p103 = pneg %p28
      $region22: #{t5_attention_forward.4} parent=19 // pred_check_branch
        %105 = sbr.rel (%p103) target = $region24
      $region23: #{t5_attention_forward.4} parent=19 // pred_region
        %p106 = scmp.lt.s32.totalorder %s8, 1
        %s107 = scalar_select %p106, %s8, 1
        %s108 = smul.addr %s107, 6
        %s109 = smul.addr %s108, 8
        %s110 = scalar_lea.vmem %s0, %s109
      $region24: #{t5_attention_forward.4} parent=19 // pred_fallthru
        _
    $region20: #{t5_attention_forward.4} parent=5 // pred_fallthru
      _
    %p111 = scmp.le.s32.totalorder 1, %s8
    %p112 = scmp.lt.s32.totalorder %s8, 3
    %p113 = pnand %p111, %p112
    %p114 = pneg %p113
    // Predicated region
    $region25: #{t5_attention_forward.4} parent=5 // pred_check
      _
    $region26: #{t5_attention_forward.4} parent=5 // pred_check_branch
      %116 = sbr.rel (%p113) target = $region28
    $region27: #{t5_attention_forward.4} parent=5 // pred_region
      %s117 = ssub.s32 %s8, 1
      %p118 = scmp.lt.s32.totalorder %s13, 1
      %s119 = scalar_select %p118, %s13, 1
      %s120 = smul.addr %s119, 6
      %s121 = smul.addr %s120, 8
      %s122 = scalar_lea.vmem %s0, %s121
      %p123 = pneg %p34
      %p124 = pneg %p31
      %p125 = pneg %p55
      %p126 = pneg %p52
      %p127 = pneg %p81
      %p128 = pneg %p78
      %p129 = scmp.lt.s32.totalorder %s13, 1
      %s130 = scalar_select %p129, %s13, 1
      %s131 = smul.addr %s130, 2
      %s132 = smul.addr %s131, 8
      %s133 = scalar_lea.vmem %s2, %s132
      %p134 = scmp.lt.s32.totalorder %s13, 1
      %s135 = scalar_select %p134, %s13, 1
      %s136 = smul.addr %s135, 6
      %s137 = smul.addr %s136, 8
      %s138 = scalar_lea.vmem %s0, %s137
      %p139 = scmp.lt.s32.totalorder %s13, 1
      %s140 = scalar_select %p139, %s13, 1
      %s141 = smul.addr %s140, 2
      %s142 = smul.addr %s141, 8
      %s143 = scalar_lea.vmem %s2, %s142
      %v144 = vld [vmem:[%s138] sm:$0xff]
      %v145 = vld [vmem:[%s138 + $0x18] sm:$0xff]
      %v146 = vld [vmem:[%s138 + $0x8] sm:$0xff]
      %v147 = vld [vmem:[%s138 + $0x20] sm:$0xff]
      %v148 = vld [vmem:[%s138 + $0x10] sm:$0xff]
      %v149 = vld [vmem:[%s138 + $0x28] sm:$0xff]
      %v150 = vld [vmem:[%s1] sm:$0xff]
      %v151 = vld [vmem:[%s1 + $0x8] sm:$0xff]
      %vm152 = vcmask 261120
      %v154 = vsel %vm152, %v144, 0
      %v157 = vsel %vm152, %v145, 0
      %v160 = vsel %vm152, %v146, 0
      %v163 = vsel %vm152, %v147, 0
      %165 = vmatprep.subr.mxu0 0.0
      %166 = vmatpush1.xpose.msra.mxu0 %v160
      %167 = vmatprep.subr.mxu0 0.0
      %168 = vmatpush1.xpose.msra.mxu0 %v163
      %169 = vmatprep.subr.mxu0 0.0
      %170 = vmatpush1.xpose.msra.mxu0 0.0
      %171 = vmatprep.subr.mxu0 0.0
      %172 = vmatpush1.xpose.msra.mxu0 0.0
      %173 = vmatprep.subr.mxu0 0.0
      %174 = vmatpush1.xpose.msra.mxu0 0.0
      %175 = vmatprep.subr.mxu0 0.0
      %176 = vmatpush1.xpose.msra.mxu0 0.0
      %177 = vmatprep.subr.mxu0 0.0
      %178 = vmatpush1.xpose.msra.mxu0 0.0
      %179 = vmatprep.subr.mxu0 0.0
      %180 = vmatpush1.xpose.msra.mxu0 0.0
      %181 = vmatprep.subr.mxu0 0.0
      %182 = vmatpush1.xpose.msra.mxu0 0.0
      %183 = vmatprep.subr.mxu0 0.0
      %184 = vmatpush1.xpose.msra.mxu0 0.0
      %185 = vmatprep.subr.mxu0 0.0
      %186 = vmatpush1.xpose.msra.mxu0 0.0
      %187 = vmatprep.subr.mxu0 0.0
      %188 = vmatpush1.xpose.msra.mxu0 0.0
      %189 = vmatprep.subr.mxu0 0.0
      %190 = vmatpush1.xpose.msra.mxu0 0.0
      %191 = vmatprep.subr.mxu0 0.0
      %192 = vmatpush1.xpose.msra.mxu0 0.0
      %193 = vmatprep.subr.mxu0 0.0
      %194 = vmatpush1.xpose.msra.mxu0 0.0
      %195 = vmatprep.subr.mxu0 0.0
      %196 = vmatpush1.xpose.msra.mxu0 0.0
      %197 = vmatprep.subr.mxu0 0.0
      %198 = vmatpush1.xpose.msra.mxu0 0.0
      %199 = vmatprep.subr.mxu0 0.0
      %200 = vmatpush1.xpose.msra.mxu0 0.0
      %201 = vmatprep.subr.mxu0 0.0
      %202 = vmatpush1.xpose.msra.mxu0 0.0
      %203 = vmatprep.subr.mxu0 0.0
      %204 = vmatpush1.xpose.msra.mxu0 0.0
      %205 = vmatprep.subr.mxu0 0.0
      %206 = vmatpush1.xpose.msra.mxu0 0.0
      %207 = vmatprep.subr.mxu0 0.0
      %208 = vmatpush1.xpose.msra.mxu0 0.0
      %209 = vmatprep.subr.mxu0 0.0
      %210 = vmatpush1.xpose.msra.mxu0 0.0
      %211 = vmatprep.subr.mxu0 0.0
      %212 = vmatpush1.xpose.msra.mxu0 0.0
      %213 = vmatprep.subr.mxu0 0.0
      %214 = vmatpush1.xpose.msra.mxu0 0.0
      %215 = vmatprep.subr.mxu0 0.0
      %216 = vmatpush1.xpose.msra.mxu0 0.0
      %217 = vmatprep.subr.mxu0 0.0
      %218 = vmatpush1.xpose.msra.mxu0 0.0
      %219 = vmatprep.subr.mxu0 0.0
      %220 = vmatpush1.xpose.msra.mxu0 0.0
      %221 = vmatprep.subr.mxu0 0.0
      %222 = vmatpush1.xpose.msra.mxu0 0.0
      %223 = vmatprep.subr.mxu0 0.0
      %224 = vmatpush1.xpose.msra.mxu0 0.0
      %225 = vmatprep.subr.mxu0 0.0
      %226 = vmatpush1.xpose.msra.mxu0 0.0
      %227 = vmatprep.subr.mxu0 0.0
      %228 = vmatpush1.xpose.msra.mxu0 0.0
      %229 = vmatprep.mubr.f32.mxu0 0.0
      %230 = vmatmul.mubr.f32.gmra.mrb[0].mxu0 %v154
      %v231 = vpop.f32.mrb[0].mxu0
      %v232 = vadd.f32 %v150, %v231
      %v233 = vpop.f32.mrb[0].mxu0
      %234 = vmatprep.mubr.f32.mxu0 0.0
      %235 = vmatmul.mubr.f32.gmra.mrb[0].mxu0 %v157
      %v236 = vpop.f32.mrb[0].mxu0
      %v237 = vadd.f32 %v151, %v236
      %v238 = vpop.f32.mrb[0].mxu0
      %239 = vdwg.mxu0
      %vm240 = vcmask 130048
      %v241 = vsel %vm240, %v232, -inf
      %242 = vmax.xlane.f32.xlu0 %v241
      %v243 = vpop.xlane.xlu0 %242
      %v244 = vsel %vm240, %v237, -inf
      %245 = vmax.xlane.f32.xlu0 %v244
      %v246 = vpop.xlane.xlu0 %245
      %v247 = vsub.f32 %v232, %v243
      %v248 = vsub.f32 %v237, %v246
      %v249 = vmul.f32 %v247, 1.442695
      %v250 = vpow.pop %v249
      %v251 = vmul.f32 %v248, 1.442695
      %v252 = vpow.pop %v251
      %v253 = vsel %vm240, %v250, 0.0
      %254 = vadd.xlane.f32.xlu0 %v253
      %v255 = vpop.xlane.xlu0 %254
      %v256 = vsel %vm240, %v252, 0.0
      %257 = vadd.xlane.f32.xlu0 %v256
      %v258 = vpop.xlane.xlu0 %257
      %v259 = vrcp.pop %v255
      %v260 = vrcp.pop %v258
      %v261 = vmul.f32 %v250, %v259
      %v262 = vmul.f32 %v252, %v260
      %v264 = vsel %vm240, %v261, 0
      %v267 = vsel %vm240, %v262, 0
      %269 = vmatprep.subr.mxu0 0.0
      %270 = vmatpush1.msra.mxu0 %v148
      %271 = vmatprep.subr.mxu0 0.0
      %272 = vmatpush1.msra.mxu0 %v149
      %273 = vmatprep.subr.mxu0 0.0
      %274 = vmatpush1.msra.mxu0 0.0
      %275 = vmatprep.subr.mxu0 0.0
      %276 = vmatpush1.msra.mxu0 0.0
      %277 = vmatprep.subr.mxu0 0.0
      %278 = vmatpush1.msra.mxu0 0.0
      %279 = vmatprep.subr.mxu0 0.0
      %280 = vmatpush1.msra.mxu0 0.0
      %281 = vmatprep.subr.mxu0 0.0
      %282 = vmatpush1.msra.mxu0 0.0
      %283 = vmatprep.subr.mxu0 0.0
      %284 = vmatpush1.msra.mxu0 0.0
      %285 = vmatprep.subr.mxu0 0.0
      %286 = vmatpush1.msra.mxu0 0.0
      %287 = vmatprep.subr.mxu0 0.0
      %288 = vmatpush1.msra.mxu0 0.0
      %289 = vmatprep.subr.mxu0 0.0
      %290 = vmatpush1.msra.mxu0 0.0
      %291 = vmatprep.subr.mxu0 0.0
      %292 = vmatpush1.msra.mxu0 0.0
      %293 = vmatprep.subr.mxu0 0.0
      %294 = vmatpush1.msra.mxu0 0.0
      %295 = vmatprep.subr.mxu0 0.0
      %296 = vmatpush1.msra.mxu0 0.0
      %297 = vmatprep.subr.mxu0 0.0
      %298 = vmatpush1.msra.mxu0 0.0
      %299 = vmatprep.subr.mxu0 0.0
      %300 = vmatpush1.msra.mxu0 0.0
      %301 = vmatprep.subr.mxu0 0.0
      %302 = vmatpush1.msra.mxu0 0.0
      %303 = vmatprep.subr.mxu0 0.0
      %304 = vmatpush1.msra.mxu0 0.0
      %305 = vmatprep.subr.mxu0 0.0
      %306 = vmatpush1.msra.mxu0 0.0
      %307 = vmatprep.subr.mxu0 0.0
      %308 = vmatpush1.msra.mxu0 0.0
      %309 = vmatprep.subr.mxu0 0.0
      %310 = vmatpush1.msra.mxu0 0.0
      %311 = vmatprep.subr.mxu0 0.0
      %312 = vmatpush1.msra.mxu0 0.0
      %313 = vmatprep.subr.mxu0 0.0
      %314 = vmatpush1.msra.mxu0 0.0
      %315 = vmatprep.subr.mxu0 0.0
      %316 = vmatpush1.msra.mxu0 0.0
      %317 = vmatprep.subr.mxu0 0.0
      %318 = vmatpush1.msra.mxu0 0.0
      %319 = vmatprep.subr.mxu0 0.0
      %320 = vmatpush1.msra.mxu0 0.0
      %321 = vmatprep.subr.mxu0 0.0
      %322 = vmatpush1.msra.mxu0 0.0
      %323 = vmatprep.subr.mxu0 0.0
      %324 = vmatpush1.msra.mxu0 0.0
      %325 = vmatprep.subr.mxu0 0.0
      %326 = vmatpush1.msra.mxu0 0.0
      %327 = vmatprep.subr.mxu0 0.0
      %328 = vmatpush1.msra.mxu0 0.0
      %329 = vmatprep.subr.mxu0 0.0
      %330 = vmatpush1.msra.mxu0 0.0
      %331 = vmatprep.subr.mxu0 0.0
      %332 = vmatpush1.msra.mxu0 0.0
      %333 = vmatprep.mubr.f32.mxu0 0.0
      %334 = vmatmul.mubr.f32.gmra.mrb[0].mxu0 %v264
      %v335 = vpop.f32.mrb[0].mxu0
      %v336 = vadd.f32 0.0, %v335
      %v337 = vpop.f32.mrb[0].mxu0
      %338 = vmatprep.mubr.f32.mxu0 0.0
      %339 = vmatmul.mubr.f32.gmra.mrb[0].mxu0 %v267
      %v340 = vpop.f32.mrb[0].mxu0
      %v341 = vadd.f32 0.0, %v340
      %v342 = vpop.f32.mrb[0].mxu0
      %343 = vdwg.mxu0
      %s344 = scalar_lea.vmem %s1, 16
      %v345 = vld [vmem:[%s344] sm:$0xff]
      %v346 = vld [vmem:[%s344 + $0x8] sm:$0xff]
      %347 = vrot.lane.b32.xlu0 %v144, 96
      %v348 = vpop.permute.xlu0 %347
      %349 = vrot.lane.b32.xlu0 %v145, 96
      %v350 = vpop.permute.xlu0 %349
      %351 = vrot.lane.b32.xlu0 %v146, 96
      %v352 = vpop.permute.xlu0 %351
      %353 = vrot.lane.b32.xlu0 %v147, 96
      %v354 = vpop.permute.xlu0 %353
      %v355 = vsel %vm152, %v348, 0
      %v357 = vsel %vm152, %v350, 0
      %v359 = vsel %vm152, %v352, 0
      %v361 = vsel %vm152, %v354, 0
      %363 = vmatprep.subr.mxu0 0.0
      %364 = vmatpush1.xpose.msra.mxu0 %v359
      %365 = vmatprep.subr.mxu0 0.0
      %366 = vmatpush1.xpose.msra.mxu0 %v361
      %367 = vmatprep.subr.mxu0 0.0
      %368 = vmatpush1.xpose.msra.mxu0 0.0
      %369 = vmatprep.subr.mxu0 0.0
      %370 = vmatpush1.xpose.msra.mxu0 0.0
      %371 = vmatprep.subr.mxu0 0.0
      %372 = vmatpush1.xpose.msra.mxu0 0.0
      %373 = vmatprep.subr.mxu0 0.0
      %374 = vmatpush1.xpose.msra.mxu0 0.0
      %375 = vmatprep.subr.mxu0 0.0
      %376 = vmatpush1.xpose.msra.mxu0 0.0
      %377 = vmatprep.subr.mxu0 0.0
      %378 = vmatpush1.xpose.msra.mxu0 0.0
      %379 = vmatprep.subr.mxu0 0.0
      %380 = vmatpush1.xpose.msra.mxu0 0.0
      %381 = vmatprep.subr.mxu0 0.0
      %382 = vmatpush1.xpose.msra.mxu0 0.0
      %383 = vmatprep.subr.mxu0 0.0
      %384 = vmatpush1.xpose.msra.mxu0 0.0
      %385 = vmatprep.subr.mxu0 0.0
      %386 = vmatpush1.xpose.msra.mxu0 0.0
      %387 = vmatprep.subr.mxu0 0.0
      %388 = vmatpush1.xpose.msra.mxu0 0.0
      %389 = vmatprep.subr.mxu0 0.0
      %390 = vmatpush1.xpose.msra.mxu0 0.0
      %391 = vmatprep.subr.mxu0 0.0
      %392 = vmatpush1.xpose.msra.mxu0 0.0
      %393 = vmatprep.subr.mxu0 0.0
      %394 = vmatpush1.xpose.msra.mxu0 0.0
      %395 = vmatprep.subr.mxu0 0.0
      %396 = vmatpush1.xpose.msra.mxu0 0.0
      %397 = vmatprep.subr.mxu0 0.0
      %398 = vmatpush1.xpose.msra.mxu0 0.0
      %399 = vmatprep.subr.mxu0 0.0
      %400 = vmatpush1.xpose.msra.mxu0 0.0
      %401 = vmatprep.subr.mxu0 0.0
      %402 = vmatpush1.xpose.msra.mxu0 0.0
      %403 = vmatprep.subr.mxu0 0.0
      %404 = vmatpush1.xpose.msra.mxu0 0.0
      %405 = vmatprep.subr.mxu0 0.0
      %406 = vmatpush1.xpose.msra.mxu0 0.0
      %407 = vmatprep.subr.mxu0 0.0
      %408 = vmatpush1.xpose.msra.mxu0 0.0
      %409 = vmatprep.subr.mxu0 0.0
      %410 = vmatpush1.xpose.msra.mxu0 0.0
      %411 = vmatprep.subr.mxu0 0.0
      %412 = vmatpush1.xpose.msra.mxu0 0.0
      %413 = vmatprep.subr.mxu0 0.0
      %414 = vmatpush1.xpose.msra.mxu0 0.0
      %415 = vmatprep.subr.mxu0 0.0
      %416 = vmatpush1.xpose.msra.mxu0 0.0
      %417 = vmatprep.subr.mxu0 0.0
      %418 = vmatpush1.xpose.msra.mxu0 0.0
      %419 = vmatprep.subr.mxu0 0.0
      %420 = vmatpush1.xpose.msra.mxu0 0.0
      %421 = vmatprep.subr.mxu0 0.0
      %422 = vmatpush1.xpose.msra.mxu0 0.0
      %423 = vmatprep.subr.mxu0 0.0
      %424 = vmatpush1.xpose.msra.mxu0 0.0
      %425 = vmatprep.subr.mxu0 0.0
      %426 = vmatpush1.xpose.msra.mxu0 0.0
      %427 = vmatprep.mubr.f32.mxu0 0.0
      %428 = vmatmul.mubr.f32.gmra.mrb[0].mxu0 %v355
      %v429 = vpop.f32.mrb[0].mxu0
      %v430 = vadd.f32 %v345, %v429
      %v431 = vpop.f32.mrb[0].mxu0
      %432 = vmatprep.mubr.f32.mxu0 0.0
      %433 = vmatmul.mubr.f32.gmra.mrb[0].mxu0 %v357
      %v434 = vpop.f32.mrb[0].mxu0
      %v435 = vadd.f32 %v346, %v434
      %v436 = vpop.f32.mrb[0].mxu0
      %437 = vdwg.mxu0
      %v438 = vsel %vm240, %v430, -inf
      %439 = vmax.xlane.f32.xlu0 %v438
      %v440 = vpop.xlane.xlu0 %439
      %v441 = vsel %vm240, %v435, -inf
      %442 = vmax.xlane.f32.xlu0 %v441
      %v443 = vpop.xlane.xlu0 %442
      %v444 = vsub.f32 %v430, %v440
      %v445 = vsub.f32 %v435, %v443
      %v446 = vmul.f32 %v444, 1.442695
      %v447 = vpow.pop %v446
      %v448 = vmul.f32 %v445, 1.442695
      %v449 = vpow.pop %v448
      %v450 = vsel %vm240, %v447, 0.0
      %451 = vadd.xlane.f32.xlu0 %v450
      %v452 = vpop.xlane.xlu0 %451
      %v453 = vsel %vm240, %v449, 0.0
      %454 = vadd.xlane.f32.xlu0 %v453
      %v455 = vpop.xlane.xlu0 %454
      %v456 = vrcp.pop %v452
      %v457 = vrcp.pop %v455
      %v458 = vmul.f32 %v447, %v456
      %v459 = vmul.f32 %v449, %v457
      %462 = vrot.lane.b32.xlu0 %v148, 96
      %v463 = vpop.permute.xlu0 %462
      %464 = vrot.lane.b32.xlu0 %v149, 96
      %v465 = vpop.permute.xlu0 %464
      %v469 = vsel %vm240, %v458, 0
      %v472 = vsel %vm240, %v459, 0
      %474 = vmatprep.subr.mxu0 0.0
      %475 = vmatpush1.msra.mxu0 %v463
      %476 = vmatprep.subr.mxu0 0.0
      %477 = vmatpush1.msra.mxu0 %v465
      %478 = vmatprep.subr.mxu0 0.0
      %479 = vmatpush1.msra.mxu0 0.0
      %480 = vmatprep.subr.mxu0 0.0
      %481 = vmatpush1.msra.mxu0 0.0
      %482 = vmatprep.subr.mxu0 0.0
      %483 = vmatpush1.msra.mxu0 0.0
      %484 = vmatprep.subr.mxu0 0.0
      %485 = vmatpush1.msra.mxu0 0.0
      %486 = vmatprep.subr.mxu0 0.0
      %487 = vmatpush1.msra.mxu0 0.0
      %488 = vmatprep.subr.mxu0 0.0
      %489 = vmatpush1.msra.mxu0 0.0
      %490 = vmatprep.subr.mxu0 0.0
      %491 = vmatpush1.msra.mxu0 0.0
      %492 = vmatprep.subr.mxu0 0.0
      %493 = vmatpush1.msra.mxu0 0.0
      %494 = vmatprep.subr.mxu0 0.0
      %495 = vmatpush1.msra.mxu0 0.0
      %496 = vmatprep.subr.mxu0 0.0
      %497 = vmatpush1.msra.mxu0 0.0
      %498 = vmatprep.subr.mxu0 0.0
      %499 = vmatpush1.msra.mxu0 0.0
      %500 = vmatprep.subr.mxu0 0.0
      %501 = vmatpush1.msra.mxu0 0.0
      %502 = vmatprep.subr.mxu0 0.0
      %503 = vmatpush1.msra.mxu0 0.0
      %504 = vmatprep.subr.mxu0 0.0
      %505 = vmatpush1.msra.mxu0 0.0
      %506 = vmatprep.subr.mxu0 0.0
      %507 = vmatpush1.msra.mxu0 0.0
      %508 = vmatprep.subr.mxu0 0.0
      %509 = vmatpush1.msra.mxu0 0.0
      %510 = vmatprep.subr.mxu0 0.0
      %511 = vmatpush1.msra.mxu0 0.0
      %512 = vmatprep.subr.mxu0 0.0
      %513 = vmatpush1.msra.mxu0 0.0
      %514 = vmatprep.subr.mxu0 0.0
      %515 = vmatpush1.msra.mxu0 0.0
      %516 = vmatprep.subr.mxu0 0.0
      %517 = vmatpush1.msra.mxu0 0.0
      %518 = vmatprep.subr.mxu0 0.0
      %519 = vmatpush1.msra.mxu0 0.0
      %520 = vmatprep.subr.mxu0 0.0
      %521 = vmatpush1.msra.mxu0 0.0
      %522 = vmatprep.subr.mxu0 0.0
      %523 = vmatpush1.msra.mxu0 0.0
      %524 = vmatprep.subr.mxu0 0.0
      %525 = vmatpush1.msra.mxu0 0.0
      %526 = vmatprep.subr.mxu0 0.0
      %527 = vmatpush1.msra.mxu0 0.0
      %528 = vmatprep.subr.mxu0 0.0
      %529 = vmatpush1.msra.mxu0 0.0
      %530 = vmatprep.subr.mxu0 0.0
      %531 = vmatpush1.msra.mxu0 0.0
      %532 = vmatprep.subr.mxu0 0.0
      %533 = vmatpush1.msra.mxu0 0.0
      %534 = vmatprep.subr.mxu0 0.0
      %535 = vmatpush1.msra.mxu0 0.0
      %536 = vmatprep.subr.mxu0 0.0
      %537 = vmatpush1.msra.mxu0 0.0
      %538 = vmatprep.mubr.f32.mxu0 0.0
      %539 = vmatmul.mubr.f32.gmra.mrb[0].mxu0 %v469
      %v540 = vpop.f32.mrb[0].mxu0
      %v541 = vadd.f32 0.0, %v540
      %v542 = vpop.f32.mrb[0].mxu0
      %543 = vmatprep.mubr.f32.mxu0 0.0
      %544 = vmatmul.mubr.f32.gmra.mrb[0].mxu0 %v472
      %v545 = vpop.f32.mrb[0].mxu0
      %v546 = vadd.f32 0.0, %v545
      %v547 = vpop.f32.mrb[0].mxu0
      %548 = vdwg.mxu0
      %s549 = scalar_lea.vmem %s1, 32
      %v550 = vld [vmem:[%s549] sm:$0xff]
      %v551 = vld [vmem:[%s549 + $0x8] sm:$0xff]
      %552 = vrot.lane.b32.xlu0 %v144, 64
      %v553 = vpop.permute.xlu0 %552
      %554 = vrot.lane.b32.xlu0 %v145, 64
      %v555 = vpop.permute.xlu0 %554
      %556 = vrot.lane.b32.xlu0 %v146, 64
      %v557 = vpop.permute.xlu0 %556
      %558 = vrot.lane.b32.xlu0 %v147, 64
      %v559 = vpop.permute.xlu0 %558
      %v560 = vsel %vm152, %v553, 0
      %v562 = vsel %vm152, %v555, 0
      %v564 = vsel %vm152, %v557, 0
      %v566 = vsel %vm152, %v559, 0
      %568 = vmatprep.subr.mxu0 0.0
      %569 = vmatpush1.xpose.msra.mxu0 %v564
      %570 = vmatprep.subr.mxu0 0.0
      %571 = vmatpush1.xpose.msra.mxu0 %v566
      %572 = vmatprep.subr.mxu0 0.0
      %573 = vmatpush1.xpose.msra.mxu0 0.0
      %574 = vmatprep.subr.mxu0 0.0
      %575 = vmatpush1.xpose.msra.mxu0 0.0
      %576 = vmatprep.subr.mxu0 0.0
      %577 = vmatpush1.xpose.msra.mxu0 0.0
      %578 = vmatprep.subr.mxu0 0.0
      %579 = vmatpush1.xpose.msra.mxu0 0.0
      %580 = vmatprep.subr.mxu0 0.0
      %581 = vmatpush1.xpose.msra.mxu0 0.0
      %582 = vmatprep.subr.mxu0 0.0
      %583 = vmatpush1.xpose.msra.mxu0 0.0
      %584 = vmatprep.subr.mxu0 0.0
      %585 = vmatpush1.xpose.msra.mxu0 0.0
      %586 = vmatprep.subr.mxu0 0.0
      %587 = vmatpush1.xpose.msra.mxu0 0.0
      %588 = vmatprep.subr.mxu0 0.0
      %589 = vmatpush1.xpose.msra.mxu0 0.0
      %590 = vmatprep.subr.mxu0 0.0
      %591 = vmatpush1.xpose.msra.mxu0 0.0
      %592 = vmatprep.subr.mxu0 0.0
      %593 = vmatpush1.xpose.msra.mxu0 0.0
      %594 = vmatprep.subr.mxu0 0.0
      %595 = vmatpush1.xpose.msra.mxu0 0.0
      %596 = vmatprep.subr.mxu0 0.0
      %597 = vmatpush1.xpose.msra.mxu0 0.0
      %598 = vmatprep.subr.mxu0 0.0
      %599 = vmatpush1.xpose.msra.mxu0 0.0
      %600 = vmatprep.subr.mxu0 0.0
      %601 = vmatpush1.xpose.msra.mxu0 0.0
      %602 = vmatprep.subr.mxu0 0.0
      %603 = vmatpush1.xpose.msra.mxu0 0.0
      %604 = vmatprep.subr.mxu0 0.0
      %605 = vmatpush1.xpose.msra.mxu0 0.0
      %606 = vmatprep.subr.mxu0 0.0
      %607 = vmatpush1.xpose.msra.mxu0 0.0
      %608 = vmatprep.subr.mxu0 0.0
      %609 = vmatpush1.xpose.msra.mxu0 0.0
      %610 = vmatprep.subr.mxu0 0.0
      %611 = vmatpush1.xpose.msra.mxu0 0.0
      %612 = vmatprep.subr.mxu0 0.0
      %613 = vmatpush1.xpose.msra.mxu0 0.0
      %614 = vmatprep.subr.mxu0 0.0
      %615 = vmatpush1.xpose.msra.mxu0 0.0
      %616 = vmatprep.subr.mxu0 0.0
      %617 = vmatpush1.xpose.msra.mxu0 0.0
      %618 = vmatprep.subr.mxu0 0.0
      %619 = vmatpush1.xpose.msra.mxu0 0.0
      %620 = vmatprep.subr.mxu0 0.0
      %621 = vmatpush1.xpose.msra.mxu0 0.0
      %622 = vmatprep.subr.mxu0 0.0
      %623 = vmatpush1.xpose.msra.mxu0 0.0
      %624 = vmatprep.subr.mxu0 0.0
      %625 = vmatpush1.xpose.msra.mxu0 0.0
      %626 = vmatprep.subr.mxu0 0.0
      %627 = vmatpush1.xpose.msra.mxu0 0.0
      %628 = vmatprep.subr.mxu0 0.0
      %629 = vmatpush1.xpose.msra.mxu0 0.0
      %630 = vmatprep.subr.mxu0 0.0
      %631 = vmatpush1.xpose.msra.mxu0 0.0
      %632 = vmatprep.mubr.f32.mxu0 0.0
      %633 = vmatmul.mubr.f32.gmra.mrb[0].mxu0 %v560
      %v634 = vpop.f32.mrb[0].mxu0
      %v635 = vadd.f32 %v550, %v634
      %v636 = vpop.f32.mrb[0].mxu0
      %637 = vmatprep.mubr.f32.mxu0 0.0
      %638 = vmatmul.mubr.f32.gmra.mrb[0].mxu0 %v562
      %v639 = vpop.f32.mrb[0].mxu0
      %v640 = vadd.f32 %v551, %v639
      %v641 = vpop.f32.mrb[0].mxu0
      %642 = vdwg.mxu0
      %v643 = vsel %vm240, %v635, -inf
      %644 = vmax.xlane.f32.xlu0 %v643
      %v645 = vpop.xlane.xlu0 %644
      %v646 = vsel %vm240, %v640, -inf
      %647 = vmax.xlane.f32.xlu0 %v646
      %v648 = vpop.xlane.xlu0 %647
      %v649 = vsub.f32 %v635, %v645
      %v650 = vsub.f32 %v640, %v648
      %v651 = vmul.f32 %v649, 1.442695
      %v652 = vpow.pop %v651
      %v653 = vmul.f32 %v650, 1.442695
      %v654 = vpow.pop %v653
      %v655 = vsel %vm240, %v652, 0.0
      %656 = vadd.xlane.f32.xlu0 %v655
      %v657 = vpop.xlane.xlu0 %656
      %v658 = vsel %vm240, %v654, 0.0
      %659 = vadd.xlane.f32.xlu0 %v658
      %v660 = vpop.xlane.xlu0 %659
      %v661 = vrcp.pop %v657
      %v662 = vrcp.pop %v660
      %v663 = vmul.f32 %v652, %v661
      %v664 = vmul.f32 %v654, %v662
      %665 = vrot.lane.b32.xlu0 %v148, 64
      %v666 = vpop.permute.xlu0 %665
      %667 = vrot.lane.b32.xlu0 %v149, 64
      %v668 = vpop.permute.xlu0 %667
      %v672 = vsel %vm240, %v663, 0
      %v675 = vsel %vm240, %v664, 0
      %677 = vmatprep.subr.mxu0 0.0
      %678 = vmatpush1.msra.mxu0 %v666
      %679 = vmatprep.subr.mxu0 0.0
      %680 = vmatpush1.msra.mxu0 %v668
      %681 = vmatprep.subr.mxu0 0.0
      %682 = vmatpush1.msra.mxu0 0.0
      %683 = vmatprep.subr.mxu0 0.0
      %684 = vmatpush1.msra.mxu0 0.0
      %685 = vmatprep.subr.mxu0 0.0
      %686 = vmatpush1.msra.mxu0 0.0
      %687 = vmatprep.subr.mxu0 0.0
      %688 = vmatpush1.msra.mxu0 0.0
      %689 = vmatprep.subr.mxu0 0.0
      %690 = vmatpush1.msra.mxu0 0.0
      %691 = vmatprep.subr.mxu0 0.0
      %692 = vmatpush1.msra.mxu0 0.0
      %693 = vmatprep.subr.mxu0 0.0
      %694 = vmatpush1.msra.mxu0 0.0
      %695 = vmatprep.subr.mxu0 0.0
      %696 = vmatpush1.msra.mxu0 0.0
      %697 = vmatprep.subr.mxu0 0.0
      %698 = vmatpush1.msra.mxu0 0.0
      %699 = vmatprep.subr.mxu0 0.0
      %700 = vmatpush1.msra.mxu0 0.0
      %701 = vmatprep.subr.mxu0 0.0
      %702 = vmatpush1.msra.mxu0 0.0
      %703 = vmatprep.subr.mxu0 0.0
      %704 = vmatpush1.msra.mxu0 0.0
      %705 = vmatprep.subr.mxu0 0.0
      %706 = vmatpush1.msra.mxu0 0.0
      %707 = vmatprep.subr.mxu0 0.0
      %708 = vmatpush1.msra.mxu0 0.0
      %709 = vmatprep.subr.mxu0 0.0
      %710 = vmatpush1.msra.mxu0 0.0
      %711 = vmatprep.subr.mxu0 0.0
      %712 = vmatpush1.msra.mxu0 0.0
      %713 = vmatprep.subr.mxu0 0.0
      %714 = vmatpush1.msra.mxu0 0.0
      %715 = vmatprep.subr.mxu0 0.0
      %716 = vmatpush1.msra.mxu0 0.0
      %717 = vmatprep.subr.mxu0 0.0
      %718 = vmatpush1.msra.mxu0 0.0
      %719 = vmatprep.subr.mxu0 0.0
      %720 = vmatpush1.msra.mxu0 0.0
      %721 = vmatprep.subr.mxu0 0.0
      %722 = vmatpush1.msra.mxu0 0.0
      %723 = vmatprep.subr.mxu0 0.0
      %724 = vmatpush1.msra.mxu0 0.0
      %725 = vmatprep.subr.mxu0 0.0
      %726 = vmatpush1.msra.mxu0 0.0
      %727 = vmatprep.subr.mxu0 0.0
      %728 = vmatpush1.msra.mxu0 0.0
      %729 = vmatprep.subr.mxu0 0.0
      %730 = vmatpush1.msra.mxu0 0.0
      %731 = vmatprep.subr.mxu0 0.0
      %732 = vmatpush1.msra.mxu0 0.0
      %733 = vmatprep.subr.mxu0 0.0
      %734 = vmatpush1.msra.mxu0 0.0
      %735 = vmatprep.subr.mxu0 0.0
      %736 = vmatpush1.msra.mxu0 0.0
      %737 = vmatprep.subr.mxu0 0.0
      %738 = vmatpush1.msra.mxu0 0.0
      %739 = vmatprep.subr.mxu0 0.0
      %740 = vmatpush1.msra.mxu0 0.0
      %741 = vmatprep.mubr.f32.mxu0 0.0
      %742 = vmatmul.mubr.f32.gmra.mrb[0].mxu0 %v672
      %v743 = vpop.f32.mrb[0].mxu0
      %v744 = vadd.f32 0.0, %v743
      %v745 = vpop.f32.mrb[0].mxu0
      %746 = vmatprep.mubr.f32.mxu0 0.0
      %747 = vmatmul.mubr.f32.gmra.mrb[0].mxu0 %v675
      %v748 = vpop.f32.mrb[0].mxu0
      %v749 = vadd.f32 0.0, %v748
      %v750 = vpop.f32.mrb[0].mxu0
      %751 = vdwg.mxu0
      %s752 = scalar_lea.vmem %s1, 48
      %v753 = vld [vmem:[%s752] sm:$0xff]
      %v754 = vld [vmem:[%s752 + $0x8] sm:$0xff]
      %755 = vrot.lane.b32.xlu0 %v144, 32
      %v756 = vpop.permute.xlu0 %755
      %757 = vrot.lane.b32.xlu0 %v145, 32
      %v758 = vpop.permute.xlu0 %757
      %759 = vrot.lane.b32.xlu0 %v146, 32
      %v760 = vpop.permute.xlu0 %759
      %761 = vrot.lane.b32.xlu0 %v147, 32
      %v762 = vpop.permute.xlu0 %761
      %v763 = vsel %vm152, %v756, 0
      %v765 = vsel %vm152, %v758, 0
      %v767 = vsel %vm152, %v760, 0
      %v769 = vsel %vm152, %v762, 0
      %771 = vmatprep.subr.mxu0 0.0
      %772 = vmatpush1.xpose.msra.mxu0 %v767
      %773 = vmatprep.subr.mxu0 0.0
      %774 = vmatpush1.xpose.msra.mxu0 %v769
      %775 = vmatprep.subr.mxu0 0.0
      %776 = vmatpush1.xpose.msra.mxu0 0.0
      %777 = vmatprep.subr.mxu0 0.0
      %778 = vmatpush1.xpose.msra.mxu0 0.0
      %779 = vmatprep.subr.mxu0 0.0
      %780 = vmatpush1.xpose.msra.mxu0 0.0
      %781 = vmatprep.subr.mxu0 0.0
      %782 = vmatpush1.xpose.msra.mxu0 0.0
      %783 = vmatprep.subr.mxu0 0.0
      %784 = vmatpush1.xpose.msra.mxu0 0.0
      %785 = vmatprep.subr.mxu0 0.0
      %786 = vmatpush1.xpose.msra.mxu0 0.0
      %787 = vmatprep.subr.mxu0 0.0
      %788 = vmatpush1.xpose.msra.mxu0 0.0
      %789 = vmatprep.subr.mxu0 0.0
      %790 = vmatpush1.xpose.msra.mxu0 0.0
      %791 = vmatprep.subr.mxu0 0.0
      %792 = vmatpush1.xpose.msra.mxu0 0.0
      %793 = vmatprep.subr.mxu0 0.0
      %794 = vmatpush1.xpose.msra.mxu0 0.0
      %795 = vmatprep.subr.mxu0 0.0
      %796 = vmatpush1.xpose.msra.mxu0 0.0
      %797 = vmatprep.subr.mxu0 0.0
      %798 = vmatpush1.xpose.msra.mxu0 0.0
      %799 = vmatprep.subr.mxu0 0.0
      %800 = vmatpush1.xpose.msra.mxu0 0.0
      %801 = vmatprep.subr.mxu0 0.0
      %802 = vmatpush1.xpose.msra.mxu0 0.0
      %803 = vmatprep.subr.mxu0 0.0
      %804 = vmatpush1.xpose.msra.mxu0 0.0
      %805 = vmatprep.subr.mxu0 0.0
      %806 = vmatpush1.xpose.msra.mxu0 0.0
      %807 = vmatprep.subr.mxu0 0.0
      %808 = vmatpush1.xpose.msra.mxu0 0.0
      %809 = vmatprep.subr.mxu0 0.0
      %810 = vmatpush1.xpose.msra.mxu0 0.0
      %811 = vmatprep.subr.mxu0 0.0
      %812 = vmatpush1.xpose.msra.mxu0 0.0
      %813 = vmatprep.subr.mxu0 0.0
      %814 = vmatpush1.xpose.msra.mxu0 0.0
      %815 = vmatprep.subr.mxu0 0.0
      %816 = vmatpush1.xpose.msra.mxu0 0.0
      %817 = vmatprep.subr.mxu0 0.0
      %818 = vmatpush1.xpose.msra.mxu0 0.0
      %819 = vmatprep.subr.mxu0 0.0
      %820 = vmatpush1.xpose.msra.mxu0 0.0
      %821 = vmatprep.subr.mxu0 0.0
      %822 = vmatpush1.xpose.msra.mxu0 0.0
      %823 = vmatprep.subr.mxu0 0.0
      %824 = vmatpush1.xpose.msra.mxu0 0.0
      %825 = vmatprep.subr.mxu0 0.0
      %826 = vmatpush1.xpose.msra.mxu0 0.0
      %827 = vmatprep.subr.mxu0 0.0
      %828 = vmatpush1.xpose.msra.mxu0 0.0
      %829 = vmatprep.subr.mxu0 0.0
      %830 = vmatpush1.xpose.msra.mxu0 0.0
      %831 = vmatprep.subr.mxu0 0.0
      %832 = vmatpush1.xpose.msra.mxu0 0.0
      %833 = vmatprep.subr.mxu0 0.0
      %834 = vmatpush1.xpose.msra.mxu0 0.0
      %835 = vmatprep.mubr.f32.mxu0 0.0
      %836 = vmatmul.mubr.f32.gmra.mrb[0].mxu0 %v763
      %v837 = vpop.f32.mrb[0].mxu0
      %v838 = vadd.f32 %v753, %v837
      %v839 = vpop.f32.mrb[0].mxu0
      %840 = vmatprep.mubr.f32.mxu0 0.0
      %841 = vmatmul.mubr.f32.gmra.mrb[0].mxu0 %v765
      %v842 = vpop.f32.mrb[0].mxu0
      %v843 = vadd.f32 %v754, %v842
      %v844 = vpop.f32.mrb[0].mxu0
      %845 = vdwg.mxu0
      %v846 = vsel %vm240, %v838, -inf
      %847 = vmax.xlane.f32.xlu0 %v846
      %v848 = vpop.xlane.xlu0 %847
      %v849 = vsel %vm240, %v843, -inf
      %850 = vmax.xlane.f32.xlu0 %v849
      %v851 = vpop.xlane.xlu0 %850
      %v852 = vsub.f32 %v838, %v848
      %v853 = vsub.f32 %v843, %v851
      %v854 = vmul.f32 %v852, 1.442695
      %v855 = vpow.pop %v854
      %v856 = vmul.f32 %v853, 1.442695
      %v857 = vpow.pop %v856
      %v858 = vsel %vm240, %v855, 0.0
      %859 = vadd.xlane.f32.xlu0 %v858
      %v860 = vpop.xlane.xlu0 %859
      %v861 = vsel %vm240, %v857, 0.0
      %862 = vadd.xlane.f32.xlu0 %v861
      %v863 = vpop.xlane.xlu0 %862
      %v864 = vrcp.pop %v860
      %v865 = vrcp.pop %v863
      %v866 = vmul.f32 %v855, %v864
      %v867 = vmul.f32 %v857, %v865
      %868 = vrot.lane.b32.xlu0 %v148, 32
      %v869 = vpop.permute.xlu0 %868
      %870 = vrot.lane.b32.xlu0 %v149, 32
      %v871 = vpop.permute.xlu0 %870
      %v875 = vsel %vm240, %v866, 0
      %v878 = vsel %vm240, %v867, 0
      %880 = vmatprep.subr.mxu0 0.0
      %881 = vmatpush1.msra.mxu0 %v869
      %882 = vmatprep.subr.mxu0 0.0
      %883 = vmatpush1.msra.mxu0 %v871
      %884 = vmatprep.subr.mxu0 0.0
      %885 = vmatpush1.msra.mxu0 0.0
      %886 = vmatprep.subr.mxu0 0.0
      %887 = vmatpush1.msra.mxu0 0.0
      %888 = vmatprep.subr.mxu0 0.0
      %889 = vmatpush1.msra.mxu0 0.0
      %890 = vmatprep.subr.mxu0 0.0
      %891 = vmatpush1.msra.mxu0 0.0
      %892 = vmatprep.subr.mxu0 0.0
      %893 = vmatpush1.msra.mxu0 0.0
      %894 = vmatprep.subr.mxu0 0.0
      %895 = vmatpush1.msra.mxu0 0.0
      %896 = vmatprep.subr.mxu0 0.0
      %897 = vmatpush1.msra.mxu0 0.0
      %898 = vmatprep.subr.mxu0 0.0
      %899 = vmatpush1.msra.mxu0 0.0
      %900 = vmatprep.subr.mxu0 0.0
      %901 = vmatpush1.msra.mxu0 0.0
      %902 = vmatprep.subr.mxu0 0.0
      %903 = vmatpush1.msra.mxu0 0.0
      %904 = vmatprep.subr.mxu0 0.0
      %905 = vmatpush1.msra.mxu0 0.0
      %906 = vmatprep.subr.mxu0 0.0
      %907 = vmatpush1.msra.mxu0 0.0
      %908 = vmatprep.subr.mxu0 0.0
      %909 = vmatpush1.msra.mxu0 0.0
      %910 = vmatprep.subr.mxu0 0.0
      %911 = vmatpush1.msra.mxu0 0.0
      %912 = vmatprep.subr.mxu0 0.0
      %913 = vmatpush1.msra.mxu0 0.0
      %914 = vmatprep.subr.mxu0 0.0
      %915 = vmatpush1.msra.mxu0 0.0
      %916 = vmatprep.subr.mxu0 0.0
      %917 = vmatpush1.msra.mxu0 0.0
      %918 = vmatprep.subr.mxu0 0.0
      %919 = vmatpush1.msra.mxu0 0.0
      %920 = vmatprep.subr.mxu0 0.0
      %921 = vmatpush1.msra.mxu0 0.0
      %922 = vmatprep.subr.mxu0 0.0
      %923 = vmatpush1.msra.mxu0 0.0
      %924 = vmatprep.subr.mxu0 0.0
      %925 = vmatpush1.msra.mxu0 0.0
      %926 = vmatprep.subr.mxu0 0.0
      %927 = vmatpush1.msra.mxu0 0.0
      %928 = vmatprep.subr.mxu0 0.0
      %929 = vmatpush1.msra.mxu0 0.0
      %930 = vmatprep.subr.mxu0 0.0
      %931 = vmatpush1.msra.mxu0 0.0
      %932 = vmatprep.subr.mxu0 0.0
      %933 = vmatpush1.msra.mxu0 0.0
      %934 = vmatprep.subr.mxu0 0.0
      %935 = vmatpush1.msra.mxu0 0.0
      %936 = vmatprep.subr.mxu0 0.0
      %937 = vmatpush1.msra.mxu0 0.0
      %938 = vmatprep.subr.mxu0 0.0
      %939 = vmatpush1.msra.mxu0 0.0
      %940 = vmatprep.subr.mxu0 0.0
      %941 = vmatpush1.msra.mxu0 0.0
      %942 = vmatprep.subr.mxu0 0.0
      %943 = vmatpush1.msra.mxu0 0.0
      %944 = vmatprep.mubr.f32.mxu0 0.0
      %945 = vmatmul.mubr.f32.gmra.mrb[0].mxu0 %v875
      %v946 = vpop.f32.mrb[0].mxu0
      %v947 = vadd.f32 0.0, %v946
      %v948 = vpop.f32.mrb[0].mxu0
      %949 = vmatprep.mubr.f32.mxu0 0.0
      %950 = vmatmul.mubr.f32.gmra.mrb[0].mxu0 %v878
      %v951 = vpop.f32.mrb[0].mxu0
      %v952 = vadd.f32 0.0, %v951
      %v953 = vpop.f32.mrb[0].mxu0
      %954 = vdwg.mxu0
      %957 = vrot.lane.b32.xlu0 %v541, 32
      %v958 = vpop.permute.xlu0 %957
      %959 = vrot.lane.b32.xlu0 %v546, 32
      %v960 = vpop.permute.xlu0 %959
      %965 = vrot.lane.b32.xlu0 %v744, 64
      %v966 = vpop.permute.xlu0 %965
      %967 = vrot.lane.b32.xlu0 %v749, 64
      %v968 = vpop.permute.xlu0 %967
      %973 = vrot.lane.b32.xlu0 %v947, 96
      %v974 = vpop.permute.xlu0 %973
      %975 = vrot.lane.b32.xlu0 %v952, 96
      %v976 = vpop.permute.xlu0 %975
      %v979 = vsel %vm152, %v336, %v958
      %v980 = vsel %vm152, %v341, %v960
      %vm981 = vcmask 523264
      %v982 = vsel %vm981, %v979, %v966
      %v983 = vsel %vm981, %v980, %v968
      %vm984 = vcmask 785408
      %v985 = vsel %vm984, %v982, %v974
      %v986 = vsel %vm984, %v983, %v976
      %987 = vst [vmem:[%s143] sm:$0xff] %v985
      %988 = vst [vmem:[%s143 + $0x8] sm:$0xff] %v986
      %p989 = scmp.lt.s32.totalorder %s13, 1
      %s990 = scalar_select %p989, %s13, 1
      %s991 = smul.addr %s990, 2
      %s992 = smul.addr %s991, 8
      %s993 = scalar_lea.vmem %s2, %s992
      // Predicated region
      $region29: #{t5_attention_forward.4} parent=27 // pred_check
        %p994 = pneg %p78
      $region30: #{t5_attention_forward.4} parent=27 // pred_check_branch
        %996 = sbr.rel (%p994) target = $region32
      $region31: #{t5_attention_forward.4} parent=27 // pred_region
        _
      $region32: #{t5_attention_forward.4} parent=27 // pred_fallthru
        _
    $region28: #{t5_attention_forward.4} parent=5 // pred_fallthru
      _
    %p997 = scmp.le.s32.totalorder 2, %s8
    // Predicated region
    $region33: #{t5_attention_forward.4} parent=5 // pred_check
      %p998 = pneg %p997
    $region34: #{t5_attention_forward.4} parent=5 // pred_check_branch
      %1000 = sbr.rel (%p998) target = $region36
    $region35: #{t5_attention_forward.4} parent=5 // pred_region
      %s1001 = ssub.s32 %s8, 2
      // Predicated region
      $region37: #{t5_attention_forward.4} parent=35 // pred_check
        %p1002 = pneg %p84
      $region38: #{t5_attention_forward.4} parent=35 // pred_check_branch
        %1004 = sbr.rel (%p1002) target = $region40
      $region39: #{t5_attention_forward.4} parent=35 // pred_region
        %p1005 = scmp.lt.s32.totalorder %s14, 1
        %s1006 = scalar_select %p1005, %s14, 1
        %s1007 = smul.addr %s1006, 2
        %s1008 = smul.addr %s1007, 8
        %s1009 = scalar_lea.vmem %s2, %s1008
      $region40: #{t5_attention_forward.4} parent=35 // pred_fallthru
        _
    $region36: #{t5_attention_forward.4} parent=5 // pred_fallthru
      _
  $region6: #{t5_attention_forward.4} parent=0 // loop_footer
    %s12 = sadd.s32 1, %s8
  $region7: #{t5_attention_forward.4} parent=0 // loop_footer_branch
    %7 = sbr.rel target = $region3
  $region8: #{t5_attention_forward.4} parent=0 // loop_exit
    _

</llo_original>
